<compile_context>
chip_gen: v6e
topology: v6e:2x2x1
jax: 0.10.0
libtpu: 0.0.40
codegen_flags: <defaults>
</compile_context>

<pallas_src>
import math
from functools import partial

import jax
import jax.numpy as jnp
from jax.experimental import pallas as pl
from jax.experimental.pallas import tpu as pltpu

LN_EPS = 1e-5


# ----------------------------- chip-aware config ----------------------------

_VMEM_LIMIT = None


def _vmem_limit_bytes():
    """~80% of physical VMEM, capped at 100 MiB.

    v7x (64 MiB physical)  -> ~51 MiB (leave compiler scratch headroom)
    v5e/v6e (128 MiB)      -> 100 MiB (use the larger VMEM for bigger tiles)
    """
    global _VMEM_LIMIT
    if _VMEM_LIMIT is None:
        cap = 128 * 1024 * 1024
        try:
            info = pltpu.get_tpu_info()
            cap = int(getattr(info, "vmem_capacity_bytes", cap) or cap)
        except Exception:
            pass
        _VMEM_LIMIT = min(int(cap * 0.8), 100 * 1024 * 1024)
    return _VMEM_LIMIT


def _cparams(*sem):
    return pltpu.CompilerParams(dimension_semantics=sem,
                                vmem_limit_bytes=_vmem_limit_bytes())


_BUFFERED_OK = None


def _probe_buffered():
    """Check once whether pipeline_mode=pl.Buffered(1) is supported & correct."""
    try:
        def _k(x_ref, o_ref):
            o_ref[...] = x_ref[...] * 2.0
        f = pl.pallas_call(
            _k,
            out_shape=jax.ShapeDtypeStruct((16, 128), jnp.float32),
            grid=(2,),
            in_specs=[pl.BlockSpec((8, 128), lambda i: (0, 0),
                                   pipeline_mode=pl.Buffered(1))],
            out_specs=pl.BlockSpec((8, 128), lambda i: (i, 0)),
        )
        out = jax.block_until_ready(f(jnp.ones((8, 128), jnp.float32)))
        return bool(jnp.allclose(out, 2.0))
    except Exception:
        return False


def _resident_spec(block_shape, index_map):
    """BlockSpec for a block whose index never changes (weights / gains / biases).

    Single-buffered when supported: the block is DMA'd once, so a second buffer
    is pure VMEM waste (matters most on v7x's 64 MiB VMEM at GPT-2 L/XL sizes).
    """
    global _BUFFERED_OK
    if _BUFFERED_OK is None:
        _BUFFERED_OK = _probe_buffered()
    if _BUFFERED_OK:
        return pl.BlockSpec(block_shape, index_map, pipeline_mode=pl.Buffered(1))
    return pl.BlockSpec(block_shape, index_map)


# ----------------------------- tiling helpers -------------------------------

def _row_tile(M, target=512):
    """Largest tile <= target that divides M and is a multiple of 8 (or M itself)."""
    if M <= target:
        return M
    t = (target // 8) * 8
    while t >= 8:
        if M % t == 0:
            return t
        t -= 8
    return M


def _col_tile(N, target=512):
    """Largest lane-dense tile <= target that divides N (or N itself)."""
    if N <= target:
        return N
    t = (target // 128) * 128
    while t >= 128:
        if N % t == 0:
            return t
        t -= 128
    return N


def _heads_per_group(n_heads, head_dim):
    """Smallest head group with lane-dense width (multiple of 128); else all heads."""
    for g in range(1, n_heads + 1):
        if n_heads % g == 0 and (g * head_dim) % 128 == 0:
            return g
    return n_heads


def _layer_norm(x, g, b):
    mean = jnp.mean(x, axis=-1, keepdims=True)
    var = jnp.mean((x - mean) ** 2, axis=-1, keepdims=True)
    return (x - mean) * jax.lax.rsqrt(var + LN_EPS) * g + b


# ----------------------------- Pallas kernels ------------------------------

def _ln_qkv_kernel(x_ref, g_ref, b_ref, w_ref, q_ref, k_ref, v_ref):
    # fused: LayerNorm(x) @ Wqkv (qkv_bias=False), split into q / k / v outputs
    h = _layer_norm(x_ref[...], g_ref[...], b_ref[...])
    qkv = jnp.dot(h.astype(jnp.bfloat16), w_ref[...],
                  preferred_element_type=jnp.float32)
    D = q_ref.shape[-1]
    q_ref[...] = qkv[:, :D].astype(q_ref.dtype)
    k_ref[...] = qkv[:, D:2 * D].astype(k_ref.dtype)
    v_ref[...] = qkv[:, 2 * D:].astype(v_ref.dtype)


def _attn_outproj_kernel(q_ref, k_ref, v_ref, wo_ref, bo_ref, res_ref, o_ref,
                         *, heads_per_group, scale):
    # grid = (batch, head_groups); head-group axis is a reduction: the out
    # projection of each group accumulates into the f32 residual output block.
    hg = pl.program_id(1)
    q = q_ref[0]                              # (T, Gw) bf16
    k = k_ref[0]
    v = v_ref[0]
    T, Gw = q.shape
    Dh = Gw // heads_per_group

    row = jax.lax.broadcasted_iota(jnp.int32, (T, T), 0)
    col = jax.lax.broadcasted_iota(jnp.int32, (T, T), 1)
    causal = col <= row

    outs = []
    for i in range(heads_per_group):
        qi = q[:, i * Dh:(i + 1) * Dh]
        ki = k[:, i * Dh:(i + 1) * Dh]
        vi = v[:, i * Dh:(i + 1) * Dh]
        # scores (T, T) f32; contract on Dh of both operands (no transpose)
        s = jax.lax.dot_general(qi, ki, (((1,), (1,)), ((), ())),
                                preferred_element_type=jnp.float32) * scale
        s = jnp.where(causal, s, -jnp.inf)
        m = jnp.max(s, axis=-1, keepdims=True)
        p = jnp.exp(s - m)
        l = jnp.sum(p, axis=-1, keepdims=True)
        p = p * pl.reciprocal(l, approx=True)          # EUP, off the VALU path
        outs.append(jnp.dot(p.astype(jnp.bfloat16), vi,
                            preferred_element_type=jnp.float32))
    attn = outs[0] if heads_per_group == 1 else jnp.concatenate(outs, axis=-1)
    proj = jnp.dot(attn.astype(jnp.bfloat16), wo_ref[...],
                   preferred_element_type=jnp.float32)          # (T, D)

    @pl.when(hg == 0)
    def _():
        o_ref[0] = res_ref[0] + bo_ref[...] + proj

    @pl.when(hg != 0)
    def _():
        o_ref[0] = o_ref[0] + proj


def _ln_ffn_res_kernel(x_ref, g_ref, b_ref, w1_ref, b1_ref, w2_ref, b2_ref, y_ref):
    # fused: residual + Linear(4D) o GELU(tanh) o Linear(D) applied to LayerNorm(x)
    x = x_ref[...]
    hn = _layer_norm(x, g_ref[...], b_ref[...])
    h = jnp.dot(hn.astype(jnp.bfloat16), w1_ref[...],
                preferred_element_type=jnp.float32) + b1_ref[...]
    g = 0.5 * h * (1.0 + jnp.tanh(jnp.sqrt(2.0 / jnp.pi) * (h + 0.044715 * h ** 3)))
    f = jnp.dot(g.astype(jnp.bfloat16), w2_ref[...],
                preferred_element_type=jnp.float32) + b2_ref[...]
    y_ref[...] = x + f


def _ln_lm_head_kernel(x_ref, g_ref, b_ref, w_ref, o_ref):
    # fused: final LayerNorm + LM head (bias-free Linear); LN recompute per vocab
    # tile is negligible VPU work relative to the matmul.
    h = _layer_norm(x_ref[...], g_ref[...], b_ref[...])
    o_ref[...] = jnp.dot(h.astype(jnp.bfloat16), w_ref[...],
                         preferred_element_type=jnp.float32)


# ------------------------------ wrappers -----------------------------------

def ln_qkv(x, g, b, wqkv, *, tm):
    M, D = x.shape
    N3 = wqkv.shape[1]
    shp = jax.ShapeDtypeStruct((M, D), jnp.bfloat16)
    return pl.pallas_call(
        _ln_qkv_kernel,
        out_shape=(shp, shp, shp),
        grid=(M // tm,),
        in_specs=[pl.BlockSpec((tm, D), lambda i: (i, 0)),
                  _resident_spec((1, D), lambda i: (0, 0)),
                  _resident_spec((1, D), lambda i: (0, 0)),
                  _resident_spec((D, N3), lambda i: (0, 0))],      # weight-resident
        out_specs=(pl.BlockSpec((tm, D), lambda i: (i, 0)),
                   pl.BlockSpec((tm, D), lambda i: (i, 0)),
                   pl.BlockSpec((tm, D), lambda i: (i, 0))),
        compiler_params=_cparams("parallel"),
        cost_estimate=pl.CostEstimate(
            flops=2 * M * D * N3, transcendentals=0,
            bytes_accessed=M * D * 4 + D * N3 * 2 + 3 * M * D * 2),
    )(x, g, b, wqkv)


def attention_outproj_residual(q, k, v, wo, bo, res, n_heads):
    """x + Wo(CausalAttn(q, k, v)) + bo, fused in one kernel.

    grid = (B, head_groups): B parallel (megacore), head groups reduce into the
    residual output (so the attention output never round-trips HBM).
    """
    B, T, D = q.shape
    Dh = D // n_heads
    g = _heads_per_group(n_heads, Dh)
    Gw = g * Dh
    n_groups = n_heads // g
    kern = partial(_attn_outproj_kernel, heads_per_group=g,
                   scale=1.0 / math.sqrt(Dh))
    return pl.pallas_call(
        kern,
        out_shape=jax.ShapeDtypeStruct((B, T, D), jnp.float32),
        grid=(B, n_groups),
        in_specs=[pl.BlockSpec((1, T, Gw), lambda b, h: (b, 0, h)),
                  pl.BlockSpec((1, T, Gw), lambda b, h: (b, 0, h)),
                  pl.BlockSpec((1, T, Gw), lambda b, h: (b, 0, h)),
                  pl.BlockSpec((Gw, D), lambda b, h: (h, 0)),       # Wo row slab
                  _resident_spec((1, D), lambda b, h: (0, 0)),
                  pl.BlockSpec((1, T, D), lambda b, h: (b, 0, 0))],
        out_specs=pl.BlockSpec((1, T, D), lambda b, h: (b, 0, 0)),
        compiler_params=_cparams("parallel", "arbitrary"),
        cost_estimate=pl.CostEstimate(
            flops=4 * B * T * T * D + 2 * B * T * D * D,
            transcendentals=B * n_heads * T * T,
            bytes_accessed=3 * B * T * D * 2 + 2 * B * T * D * 4
                           + B * D * D * 2 + D * 4),
    )(q, k, v, wo, bo, res)


def ln_ffn_residual(x, g, b, w1, b1, w2, b2, *, tm):
    M, D = x.shape
    Dff = w1.shape[1]
    # TODO(synk): tile Dff (N-tile for w1, reduction grid + f32 acc for w2) at
    #             GPT-2 XL sizes on v7x instead of keeping both weights resident.
    return pl.pallas_call(
        _ln_ffn_res_kernel,
        out_shape=jax.ShapeDtypeStruct((M, D), jnp.float32),
        grid=(M // tm,),
        in_specs=[pl.BlockSpec((tm, D), lambda i: (i, 0)),
                  _resident_spec((1, D), lambda i: (0, 0)),
                  _resident_spec((1, D), lambda i: (0, 0)),
                  _resident_spec((D, Dff), lambda i: (0, 0)),       # weight-resident
                  _resident_spec((1, Dff), lambda i: (0, 0)),
                  _resident_spec((Dff, D), lambda i: (0, 0)),       # weight-resident
                  _resident_spec((1, D), lambda i: (0, 0))],
        out_specs=pl.BlockSpec((tm, D), lambda i: (i, 0)),
        compiler_params=_cparams("parallel"),
        cost_estimate=pl.CostEstimate(
            flops=4 * M * D * Dff, transcendentals=M * Dff,
            bytes_accessed=2 * M * D * 4 + 2 * D * Dff * 2 + Dff * 4 + D * 4),
    )(x, g, b, w1, b1, w2, b2)


def final_ln_lm_head(x, g, b, w, vocab_size, *, tm, tn_target=512):
    """FinalLayerNorm + LM head, vocab padded to a multiple of 128."""
    M, D = x.shape
    V = vocab_size
    Vp = ((V + 127) // 128) * 128
    if w.shape[1] != Vp:
        w = jnp.pad(w, ((0, 0), (0, Vp - w.shape[1])))
    tn = _col_tile(Vp, tn_target)
    logits = pl.pallas_call(
        _ln_lm_head_kernel,
        out_shape=jax.ShapeDtypeStruct((M, Vp), jnp.float32),
        grid=(M // tm, Vp // tn),
        in_specs=[pl.BlockSpec((tm, D), lambda i, j: (i, 0)),   # x resident over vocab
                  _resident_spec((1, D), lambda i, j: (0, 0)),
                  _resident_spec((1, D), lambda i, j: (0, 0)),
                  pl.BlockSpec((D, tn), lambda i, j: (0, j))],
        out_specs=pl.BlockSpec((tm, tn), lambda i, j: (i, j)),
        compiler_params=_cparams("parallel", "parallel"),
        cost_estimate=pl.CostEstimate(
            flops=2 * M * D * Vp, transcendentals=0,
            bytes_accessed=M * D * 4 + max(M // tm, 1) * D * Vp * 2 + M * Vp * 4),
    )(x, g, b, w)
    return logits[:, :V]


# --------------------------- model composition -----------------------------

def transformer_block(p, x2, B, T, n_heads):
    # x2: (B*T, D) f32 residual stream
    D = x2.shape[1]
    tm = _row_tile(B * T)

    # attention sub-block: x + Wo(Attn(LN1(x))) + bo   (dropout = identity, eval)
    q, k, v = ln_qkv(x2, p['ln1_g'], p['ln1_b'], p['wqkv'], tm=tm)
    x2 = attention_outproj_residual(
        q.reshape(B, T, D), k.reshape(B, T, D), v.reshape(B, T, D),
        p['wo'], p['bo'], x2.reshape(B, T, D), n_heads).reshape(B * T, D)

    # feedforward sub-block: x + FFN(LN2(x))            (dropout = identity, eval)
    x2 = ln_ffn_residual(x2, p['ln2_g'], p['ln2_b'],
                         p['w1'], p['b1'], p['w2'], p['b2'], tm=tm)
    return x2


def gpt_forward(params, in_idx, cfg):
    B, T = in_idx.shape
    D, V = cfg['emb_dim'], cfg['vocab_size']

    # embedding gathers (plain-JAX glue), bf16 tables; drop_emb = identity at eval
    x = (params['tok_emb'][in_idx] + params['pos_emb'][:T][None, :, :]).astype(jnp.float32)
    x2 = x.reshape(B * T, D)

    for lp in params['layers']:
        x2 = transformer_block(lp, x2, B, T, cfg['n_heads'])

    tm = _row_tile(B * T)
    logits = final_ln_lm_head(x2, params['final_g'], params['final_b'],
                              params['out_w'], V, tm=tm)
    return logits.reshape(B, T, V)


# ----------------------------- parameter init ------------------------------

def init_params(key, cfg):
    V, D = cfg['vocab_size'], cfg['emb_dim']
    C, L = cfg['context_length'], cfg['n_layers']
    Dff = 4 * D
    Vp = ((V + 127) // 128) * 128
    keys = jax.random.split(key, 3 + L)

    def nrm(k, shape, dtype, scale=0.02):
        return (scale * jax.random.normal(k, shape)).astype(dtype)

    out_w = nrm(keys[2], (D, V), jnp.bfloat16)          # lane-dense padded vocab
    out_w = jnp.pad(out_w, ((0, 0), (0, Vp - V)))

    params = {
        'tok_emb': nrm(keys[0], (V, D), jnp.bfloat16),  # bf16 gather (half HBM traffic)
        'pos_emb': nrm(keys[1], (C, D), jnp.bfloat16),
        'final_g': jnp.ones((1, D), jnp.float32),
        'final_b': jnp.zeros((1, D), jnp.float32),
        'out_w': out_w,                                 # MXU operand -> bf16
        'layers': [],
    }
    for li in range(L):
        ks = jax.random.split(keys[3 + li], 6)
        wq = nrm(ks[0], (D, D), jnp.bfloat16)
        wk = nrm(ks[1], (D, D), jnp.bfloat16)
        wv = nrm(ks[2], (D, D), jnp.bfloat16)
        params['layers'].append({
            'ln1_g': jnp.ones((1, D), jnp.float32),
            'ln1_b': jnp.zeros((1, D), jnp.float32),
            'wqkv': jnp.concatenate([wq, wk, wv], axis=1),   # fused (D, 3D), qkv_bias=False
            'wo': nrm(ks[3], (D, D), jnp.bfloat16),
            'bo': jnp.zeros((1, D), jnp.float32),
            'ln2_g': jnp.ones((1, D), jnp.float32),
            'ln2_b': jnp.zeros((1, D), jnp.float32),
            'w1': nrm(ks[4], (D, Dff), jnp.bfloat16),
            'b1': jnp.zeros((1, Dff), jnp.float32),
            'w2': nrm(ks[5], (Dff, D), jnp.bfloat16),
            'b2': jnp.zeros((1, D), jnp.float32),
        })
    return params


# --------------------------------- main -------------------------------------

if __name__ == "__main__":
    cfg = dict(vocab_size=64, context_length=16, emb_dim=32,
               n_heads=4, n_layers=2, drop_rate=0.0, qkv_bias=False)

    key = jax.random.PRNGKey(0)
    pkey, ikey = jax.random.split(key)
    params = init_params(pkey, cfg)

    B, T = 2, 8
    in_idx = jax.random.randint(ikey, (B, T), 0, cfg['vocab_size'], dtype=jnp.int32)

    fwd = jax.jit(lambda p, idx: gpt_forward(p, idx, cfg))
    logits = fwd(params, in_idx)
    jax.block_until_ready(logits)

    assert logits.shape == (B, T, cfg['vocab_size']), logits.shape
    assert logits.dtype == jnp.float32
    print("KERNEL_OK")
</pallas_src>

<mosaic_0001>
module attributes {stable_mosaic.version = 11 : i64} {
  func.func @_ln_ffn_res_kernel(%arg0: i32, %arg1: memref<16x32xf32, #tpu.memory_space<vmem>>, %arg2: memref<1x32xf32, #tpu.memory_space<vmem>>, %arg3: memref<1x32xf32, #tpu.memory_space<vmem>>, %arg4: memref<32x128xbf16, #tpu.memory_space<vmem>>, %arg5: memref<1x128xf32, #tpu.memory_space<vmem>>, %arg6: memref<128x32xbf16, #tpu.memory_space<vmem>>, %arg7: memref<1x32xf32, #tpu.memory_space<vmem>>, %arg8: memref<16x32xf32, #tpu.memory_space<vmem>>) attributes {dimension_semantics = [#tpu.dimension_semantics<parallel>], iteration_bounds = array<i64: 1>, scalar_prefetch = 0 : i64, scratch_operands = 0 : i64, tpu.core_type = #tpu.core_type<tc>, window_params = [{transform_indices = @transform_0, window_bounds = array<i64: 16, 32>}, {pipeline_mode = #tpu.pipeline_mode<synchronous>, transform_indices = @transform_1, window_bounds = array<i64: 1, 32>}, {pipeline_mode = #tpu.pipeline_mode<synchronous>, transform_indices = @transform_2, window_bounds = array<i64: 1, 32>}, {pipeline_mode = #tpu.pipeline_mode<synchronous>, transform_indices = @transform_3, window_bounds = array<i64: 32, 128>}, {pipeline_mode = #tpu.pipeline_mode<synchronous>, transform_indices = @transform_4, window_bounds = array<i64: 1, 128>}, {pipeline_mode = #tpu.pipeline_mode<synchronous>, transform_indices = @transform_5, window_bounds = array<i64: 128, 32>}, {pipeline_mode = #tpu.pipeline_mode<synchronous>, transform_indices = @transform_6, window_bounds = array<i64: 1, 32>}, {transform_indices = @transform_7, window_bounds = array<i64: 16, 32>}]} {
    %c0 = arith.constant 0 : index
    %c0_0 = arith.constant 0 : index
    %0 = vector.load %arg1[%c0, %c0_0] : memref<16x32xf32, #tpu.memory_space<vmem>>, vector<16x32xf32>
    %c0_1 = arith.constant 0 : index
    %c0_2 = arith.constant 0 : index
    %1 = vector.load %arg2[%c0_1, %c0_2] : memref<1x32xf32, #tpu.memory_space<vmem>>, vector<1x32xf32>
    %c0_3 = arith.constant 0 : index
    %c0_4 = arith.constant 0 : index
    %2 = vector.load %arg3[%c0_3, %c0_4] : memref<1x32xf32, #tpu.memory_space<vmem>>, vector<1x32xf32>
    %cst = arith.constant dense<0.000000e+00> : vector<16xf32>
    %3 = vector.multi_reduction <add>, %0, %cst [1] : vector<16x32xf32> to vector<16xf32>
    %4 = vector.shape_cast %3 : vector<16xf32> to vector<16x1xf32>
    %cst_5 = arith.constant 3.200000e+01 : f32
    %5 = vector.broadcast %cst_5 : f32 to vector<16x1xf32>
    %6 = arith.divf %4, %5 : vector<16x1xf32>
    %7 = vector.broadcast %6 : vector<16x1xf32> to vector<16x32xf32>
    %8 = arith.subf %0, %7 : vector<16x32xf32>
    %9 = arith.mulf %8, %8 : vector<16x32xf32>
    %cst_6 = arith.constant dense<0.000000e+00> : vector<16xf32>
    %10 = vector.multi_reduction <add>, %9, %cst_6 [1] : vector<16x32xf32> to vector<16xf32>
    %11 = vector.shape_cast %10 : vector<16xf32> to vector<16x1xf32>
    %cst_7 = arith.constant 3.200000e+01 : f32
    %12 = vector.broadcast %cst_7 : f32 to vector<16x1xf32>
    %13 = arith.divf %11, %12 : vector<16x1xf32>
    %14 = vector.broadcast %6 : vector<16x1xf32> to vector<16x32xf32>
    %15 = arith.subf %0, %14 : vector<16x32xf32>
    %cst_8 = arith.constant 9.99999974E-6 : f32
    %16 = vector.broadcast %cst_8 : f32 to vector<16x1xf32>
    %17 = arith.addf %13, %16 : vector<16x1xf32>
    %18 = math.rsqrt %17 : vector<16x1xf32>
    %19 = vector.broadcast %18 : vector<16x1xf32> to vector<16x32xf32>
    %20 = arith.mulf %15, %19 : vector<16x32xf32>
    %21 = vector.broadcast %1 : vector<1x32xf32> to vector<16x32xf32>
    %22 = arith.mulf %20, %21 : vector<16x32xf32>
    %23 = vector.broadcast %2 : vector<1x32xf32> to vector<16x32xf32>
    %24 = arith.addf %22, %23 : vector<16x32xf32>
    %25 = arith.truncf %24 : vector<16x32xf32> to vector<16x32xbf16>
    %c0_9 = arith.constant 0 : index
    %c0_10 = arith.constant 0 : index
    %26 = vector.load %arg4[%c0_9, %c0_10] : memref<32x128xbf16, #tpu.memory_space<vmem>>, vector<32x128xbf16>
    %cst_11 = arith.constant dense<0.000000e+00> : vector<16x128xf32>
    %27 = tpu.matmul %25, %26, %cst_11 {dimension_numbers = #tpu.dot_dimension_numbers<[1], [0], [0], [1], [0, 0, 1, 1], [], []>} : vector<16x32xbf16>, vector<32x128xbf16>, vector<16x128xf32> -> vector<16x128xf32>
    %c0_12 = arith.constant 0 : index
    %c0_13 = arith.constant 0 : index
    %28 = vector.load %arg5[%c0_12, %c0_13] : memref<1x128xf32, #tpu.memory_space<vmem>>, vector<1x128xf32>
    %29 = vector.broadcast %28 : vector<1x128xf32> to vector<16x128xf32>
    %30 = arith.addf %27, %29 : vector<16x128xf32>
    %cst_14 = arith.constant 5.000000e-01 : f32
    %31 = vector.broadcast %cst_14 : f32 to vector<16x128xf32>
    %32 = arith.mulf %31, %30 : vector<16x128xf32>
    %cst_15 = arith.constant 0.636619746 : f32
    %33 = math.sqrt %cst_15 : f32
    %34 = arith.mulf %30, %30 : vector<16x128xf32>
    %35 = arith.mulf %30, %34 : vector<16x128xf32>
    %cst_16 = arith.constant 4.471500e-02 : f32
    %36 = vector.broadcast %cst_16 : f32 to vector<16x128xf32>
    %37 = arith.mulf %36, %35 : vector<16x128xf32>
    %38 = arith.addf %30, %37 : vector<16x128xf32>
    %39 = vector.broadcast %33 : f32 to vector<16x128xf32>
    %40 = arith.mulf %39, %38 : vector<16x128xf32>
    %41 = math.tanh %40 : vector<16x128xf32>
    %cst_17 = arith.constant 1.000000e+00 : f32
    %42 = vector.broadcast %cst_17 : f32 to vector<16x128xf32>
    %43 = arith.addf %42, %41 : vector<16x128xf32>
    %44 = arith.mulf %32, %43 : vector<16x128xf32>
    %45 = arith.truncf %44 : vector<16x128xf32> to vector<16x128xbf16>
    %c0_18 = arith.constant 0 : index
    %c0_19 = arith.constant 0 : index
    %46 = vector.load %arg6[%c0_18, %c0_19] : memref<128x32xbf16, #tpu.memory_space<vmem>>, vector<128x32xbf16>
    %cst_20 = arith.constant dense<0.000000e+00> : vector<16x32xf32>
    %47 = tpu.matmul %45, %46, %cst_20 {dimension_numbers = #tpu.dot_dimension_numbers<[1], [0], [0], [1], [0, 0, 1, 1], [], []>} : vector<16x128xbf16>, vector<128x32xbf16>, vector<16x32xf32> -> vector<16x32xf32>
    %c0_21 = arith.constant 0 : index
    %c0_22 = arith.constant 0 : index
    %48 = vector.load %arg7[%c0_21, %c0_22] : memref<1x32xf32, #tpu.memory_space<vmem>>, vector<1x32xf32>
    %49 = vector.broadcast %48 : vector<1x32xf32> to vector<16x32xf32>
    %50 = arith.addf %47, %49 : vector<16x32xf32>
    %51 = arith.addf %0, %50 : vector<16x32xf32>
    %c0_23 = arith.constant 0 : index
    %c0_24 = arith.constant 0 : index
    %52 = vector.load %arg8[%c0_23, %c0_24] : memref<16x32xf32, #tpu.memory_space<vmem>>, vector<16x32xf32>
    tpu.vector_store %arg8[%c0_23, %c0_24], %51 {strides = array<i32>} : memref<16x32xf32, #tpu.memory_space<vmem>>, vector<16x32xf32>,
    return
  }
  func.func @transform_0(%arg0: i32) -> (i32, i32) {
    %c0_i32 = arith.constant 0 : i32
    %c0_i32_0 = arith.constant 0 : i32
    return %arg0, %c0_i32 : i32, i32
  }
  func.func @transform_1(%arg0: i32) -> (i32, i32) {
    %c0_i32 = arith.constant 0 : i32
    %c0_i32_0 = arith.constant 0 : i32
    %c0_i32_1 = arith.constant 0 : i32
    return %c0_i32, %c0_i32_0 : i32, i32
  }
  func.func @transform_2(%arg0: i32) -> (i32, i32) {
    %c0_i32 = arith.constant 0 : i32
    %c0_i32_0 = arith.constant 0 : i32
    %c0_i32_1 = arith.constant 0 : i32
    return %c0_i32, %c0_i32_0 : i32, i32
  }
  func.func @transform_3(%arg0: i32) -> (i32, i32) {
    %c0_i32 = arith.constant 0 : i32
    %c0_i32_0 = arith.constant 0 : i32
    %c0_i32_1 = arith.constant 0 : i32
    return %c0_i32, %c0_i32_0 : i32, i32
  }
  func.func @transform_4(%arg0: i32) -> (i32, i32) {
    %c0_i32 = arith.constant 0 : i32
    %c0_i32_0 = arith.constant 0 : i32
    %c0_i32_1 = arith.constant 0 : i32
    return %c0_i32, %c0_i32_0 : i32, i32
  }
  func.func @transform_5(%arg0: i32) -> (i32, i32) {
    %c0_i32 = arith.constant 0 : i32
    %c0_i32_0 = arith.constant 0 : i32
    %c0_i32_1 = arith.constant 0 : i32
    return %c0_i32, %c0_i32_0 : i32, i32
  }
  func.func @transform_6(%arg0: i32) -> (i32, i32) {
    %c0_i32 = arith.constant 0 : i32
    %c0_i32_0 = arith.constant 0 : i32
    %c0_i32_1 = arith.constant 0 : i32
    return %c0_i32, %c0_i32_0 : i32, i32
  }
  func.func @transform_7(%arg0: i32) -> (i32, i32) {
    %c0_i32 = arith.constant 0 : i32
    %c0_i32_0 = arith.constant 0 : i32
    return %arg0, %c0_i32 : i32, i32
  }
}

module attributes {stable_mosaic.version = 11 : i64} {
  func.func @_ln_qkv_kernel(%arg0: i32, %arg1: memref<16x32xf32, #tpu.memory_space<vmem>>, %arg2: memref<1x32xf32, #tpu.memory_space<vmem>>, %arg3: memref<1x32xf32, #tpu.memory_space<vmem>>, %arg4: memref<32x96xbf16, #tpu.memory_space<vmem>>, %arg5: memref<16x32xbf16, #tpu.memory_space<vmem>>, %arg6: memref<16x32xbf16, #tpu.memory_space<vmem>>, %arg7: memref<16x32xbf16, #tpu.memory_space<vmem>>) attributes {dimension_semantics = [#tpu.dimension_semantics<parallel>], iteration_bounds = array<i64: 1>, scalar_prefetch = 0 : i64, scratch_operands = 0 : i64, tpu.core_type = #tpu.core_type<tc>, window_params = [{transform_indices = @transform_0, window_bounds = array<i64: 16, 32>}, {pipeline_mode = #tpu.pipeline_mode<synchronous>, transform_indices = @transform_1, window_bounds = array<i64: 1, 32>}, {pipeline_mode = #tpu.pipeline_mode<synchronous>, transform_indices = @transform_2, window_bounds = array<i64: 1, 32>}, {pipeline_mode = #tpu.pipeline_mode<synchronous>, transform_indices = @transform_3, window_bounds = array<i64: 32, 96>}, {transform_indices = @transform_4, window_bounds = array<i64: 16, 32>}, {transform_indices = @transform_5, window_bounds = array<i64: 16, 32>}, {transform_indices = @transform_6, window_bounds = array<i64: 16, 32>}]} {
    %c0 = arith.constant 0 : index
    %c0_0 = arith.constant 0 : index
    %0 = vector.load %arg1[%c0, %c0_0] : memref<16x32xf32, #tpu.memory_space<vmem>>, vector<16x32xf32>
    %c0_1 = arith.constant 0 : index
    %c0_2 = arith.constant 0 : index
    %1 = vector.load %arg2[%c0_1, %c0_2] : memref<1x32xf32, #tpu.memory_space<vmem>>, vector<1x32xf32>
    %c0_3 = arith.constant 0 : index
    %c0_4 = arith.constant 0 : index
    %2 = vector.load %arg3[%c0_3, %c0_4] : memref<1x32xf32, #tpu.memory_space<vmem>>, vector<1x32xf32>
    %cst = arith.constant dense<0.000000e+00> : vector<16xf32>
    %3 = vector.multi_reduction <add>, %0, %cst [1] : vector<16x32xf32> to vector<16xf32>
    %4 = vector.shape_cast %3 : vector<16xf32> to vector<16x1xf32>
    %cst_5 = arith.constant 3.200000e+01 : f32
    %5 = vector.broadcast %cst_5 : f32 to vector<16x1xf32>
    %6 = arith.divf %4, %5 : vector<16x1xf32>
    %7 = vector.broadcast %6 : vector<16x1xf32> to vector<16x32xf32>
    %8 = arith.subf %0, %7 : vector<16x32xf32>
    %9 = arith.mulf %8, %8 : vector<16x32xf32>
    %cst_6 = arith.constant dense<0.000000e+00> : vector<16xf32>
    %10 = vector.multi_reduction <add>, %9, %cst_6 [1] : vector<16x32xf32> to vector<16xf32>
    %11 = vector.shape_cast %10 : vector<16xf32> to vector<16x1xf32>
    %cst_7 = arith.constant 3.200000e+01 : f32
    %12 = vector.broadcast %cst_7 : f32 to vector<16x1xf32>
    %13 = arith.divf %11, %12 : vector<16x1xf32>
    %14 = vector.broadcast %6 : vector<16x1xf32> to vector<16x32xf32>
    %15 = arith.subf %0, %14 : vector<16x32xf32>
    %cst_8 = arith.constant 9.99999974E-6 : f32
    %16 = vector.broadcast %cst_8 : f32 to vector<16x1xf32>
    %17 = arith.addf %13, %16 : vector<16x1xf32>
    %18 = math.rsqrt %17 : vector<16x1xf32>
    %19 = vector.broadcast %18 : vector<16x1xf32> to vector<16x32xf32>
    %20 = arith.mulf %15, %19 : vector<16x32xf32>
    %21 = vector.broadcast %1 : vector<1x32xf32> to vector<16x32xf32>
    %22 = arith.mulf %20, %21 : vector<16x32xf32>
    %23 = vector.broadcast %2 : vector<1x32xf32> to vector<16x32xf32>
    %24 = arith.addf %22, %23 : vector<16x32xf32>
    %25 = arith.truncf %24 : vector<16x32xf32> to vector<16x32xbf16>
    %c0_9 = arith.constant 0 : index
    %c0_10 = arith.constant 0 : index
    %26 = vector.load %arg4[%c0_9, %c0_10] : memref<32x96xbf16, #tpu.memory_space<vmem>>, vector<32x96xbf16>
    %cst_11 = arith.constant dense<0.000000e+00> : vector<16x96xf32>
    %27 = tpu.matmul %25, %26, %cst_11 {dimension_numbers = #tpu.dot_dimension_numbers<[1], [0], [0], [1], [0, 0, 1, 1], [], []>} : vector<16x32xbf16>, vector<32x96xbf16>, vector<16x96xf32> -> vector<16x96xf32>
    %28 = vector.extract_strided_slice %27 {offsets = [0, 0], sizes = [16, 32], strides = [1, 1]} : vector<16x96xf32> to vector<16x32xf32>
    %29 = arith.truncf %28 : vector<16x32xf32> to vector<16x32xbf16>
    %c0_12 = arith.constant 0 : index
    %c0_13 = arith.constant 0 : index
    %30 = vector.load %arg5[%c0_12, %c0_13] : memref<16x32xbf16, #tpu.memory_space<vmem>>, vector<16x32xbf16>
    tpu.vector_store %arg5[%c0_12, %c0_13], %29 {strides = array<i32>} : memref<16x32xbf16, #tpu.memory_space<vmem>>, vector<16x32xbf16>,
    %31 = vector.extract_strided_slice %27 {offsets = [0, 32], sizes = [16, 32], strides = [1, 1]} : vector<16x96xf32> to vector<16x32xf32>
    %32 = arith.truncf %31 : vector<16x32xf32> to vector<16x32xbf16>
    %c0_14 = arith.constant 0 : index
    %c0_15 = arith.constant 0 : index
    %33 = vector.load %arg6[%c0_14, %c0_15] : memref<16x32xbf16, #tpu.memory_space<vmem>>, vector<16x32xbf16>
    tpu.vector_store %arg6[%c0_14, %c0_15], %32 {strides = array<i32>} : memref<16x32xbf16, #tpu.memory_space<vmem>>, vector<16x32xbf16>,
    %34 = vector.extract_strided_slice %27 {offsets = [0, 64], sizes = [16, 32], strides = [1, 1]} : vector<16x96xf32> to vector<16x32xf32>
    %35 = arith.truncf %34 : vector<16x32xf32> to vector<16x32xbf16>
    %c0_16 = arith.constant 0 : index
    %c0_17 = arith.constant 0 : index
    %36 = vector.load %arg7[%c0_16, %c0_17] : memref<16x32xbf16, #tpu.memory_space<vmem>>, vector<16x32xbf16>
    tpu.vector_store %arg7[%c0_16, %c0_17], %35 {strides = array<i32>} : memref<16x32xbf16, #tpu.memory_space<vmem>>, vector<16x32xbf16>,
    return
  }
  func.func @transform_0(%arg0: i32) -> (i32, i32) {
    %c0_i32 = arith.constant 0 : i32
    %c0_i32_0 = arith.constant 0 : i32
    return %arg0, %c0_i32 : i32, i32
  }
  func.func @transform_1(%arg0: i32) -> (i32, i32) {
    %c0_i32 = arith.constant 0 : i32
    %c0_i32_0 = arith.constant 0 : i32
    %c0_i32_1 = arith.constant 0 : i32
    return %c0_i32, %c0_i32_0 : i32, i32
  }
  func.func @transform_2(%arg0: i32) -> (i32, i32) {
    %c0_i32 = arith.constant 0 : i32
    %c0_i32_0 = arith.constant 0 : i32
    %c0_i32_1 = arith.constant 0 : i32
    return %c0_i32, %c0_i32_0 : i32, i32
  }
  func.func @transform_3(%arg0: i32) -> (i32, i32) {
    %c0_i32 = arith.constant 0 : i32
    %c0_i32_0 = arith.constant 0 : i32
    %c0_i32_1 = arith.constant 0 : i32
    return %c0_i32, %c0_i32_0 : i32, i32
  }
  func.func @transform_4(%arg0: i32) -> (i32, i32) {
    %c0_i32 = arith.constant 0 : i32
    %c0_i32_0 = arith.constant 0 : i32
    return %arg0, %c0_i32 : i32, i32
  }
  func.func @transform_5(%arg0: i32) -> (i32, i32) {
    %c0_i32 = arith.constant 0 : i32
    %c0_i32_0 = arith.constant 0 : i32
    return %arg0, %c0_i32 : i32, i32
  }
  func.func @transform_6(%arg0: i32) -> (i32, i32) {
    %c0_i32 = arith.constant 0 : i32
    %c0_i32_0 = arith.constant 0 : i32
    return %arg0, %c0_i32 : i32, i32
  }
}

module attributes {stable_mosaic.version = 11 : i64} {
  func.func @_attn_outproj_kernel(%arg0: i32, %arg1: i32, %arg2: memref<1x8x32xbf16, #tpu.memory_space<vmem>>, %arg3: memref<1x8x32xbf16, #tpu.memory_space<vmem>>, %arg4: memref<1x8x32xbf16, #tpu.memory_space<vmem>>, %arg5: memref<32x32xbf16, #tpu.memory_space<vmem>>, %arg6: memref<1x32xf32, #tpu.memory_space<vmem>>, %arg7: memref<1x8x32xf32, #tpu.memory_space<vmem>>, %arg8: memref<1x8x32xf32, #tpu.memory_space<vmem>>) attributes {dimension_semantics = [#tpu.dimension_semantics<parallel>, #tpu.dimension_semantics<arbitrary>], iteration_bounds = array<i64: 2, 1>, scalar_prefetch = 0 : i64, scratch_operands = 0 : i64, tpu.core_type = #tpu.core_type<tc>, window_params = [{transform_indices = @transform_0, window_bounds = array<i64: 1, 8, 32>}, {transform_indices = @transform_1, window_bounds = array<i64: 1, 8, 32>}, {transform_indices = @transform_2, window_bounds = array<i64: 1, 8, 32>}, {transform_indices = @transform_3, window_bounds = array<i64: 32, 32>}, {pipeline_mode = #tpu.pipeline_mode<synchronous>, transform_indices = @transform_4, window_bounds = array<i64: 1, 32>}, {transform_indices = @transform_5, window_bounds = array<i64: 1, 8, 32>}, {transform_indices = @transform_6, window_bounds = array<i64: 1, 8, 32>}]} {
    %c0 = arith.constant 0 : index
    %c0_0 = arith.constant 0 : index
    %c0_1 = arith.constant 0 : index
    %0 = vector.load %arg2[%c0, %c0_0, %c0_1] : memref<1x8x32xbf16, #tpu.memory_space<vmem>>, vector<1x8x32xbf16>
    %1 = vector.shape_cast %0 : vector<1x8x32xbf16> to vector<8x32xbf16>
    %c0_2 = arith.constant 0 : index
    %c0_3 = arith.constant 0 : index
    %c0_4 = arith.constant 0 : index
    %2 = vector.load %arg3[%c0_2, %c0_3, %c0_4] : memref<1x8x32xbf16, #tpu.memory_space<vmem>>, vector<1x8x32xbf16>
    %3 = vector.shape_cast %2 : vector<1x8x32xbf16> to vector<8x32xbf16>
    %c0_5 = arith.constant 0 : index
    %c0_6 = arith.constant 0 : index
    %c0_7 = arith.constant 0 : index
    %4 = vector.load %arg4[%c0_5, %c0_6, %c0_7] : memref<1x8x32xbf16, #tpu.memory_space<vmem>>, vector<1x8x32xbf16>
    %5 = vector.shape_cast %4 : vector<1x8x32xbf16> to vector<8x32xbf16>
    %6 = tpu.iota {dimensions = array<i32: 0>} : vector<8x8xi32>
    %7 = tpu.iota {dimensions = array<i32: 1>} : vector<8x8xi32>
    %8 = arith.cmpi sle, %7, %6 : vector<8x8xi32>
    %9 = vector.extract_strided_slice %1 {offsets = [0, 0], sizes = [8, 8], strides = [1, 1]} : vector<8x32xbf16> to vector<8x8xbf16>
    %10 = vector.extract_strided_slice %3 {offsets = [0, 0], sizes = [8, 8], strides = [1, 1]} : vector<8x32xbf16> to vector<8x8xbf16>
    %11 = vector.extract_strided_slice %5 {offsets = [0, 0], sizes = [8, 8], strides = [1, 1]} : vector<8x32xbf16> to vector<8x8xbf16>
    %cst = arith.constant dense<0.000000e+00> : vector<8x8xf32>
    %12 = tpu.matmul %9, %10, %cst {dimension_numbers = #tpu.dot_dimension_numbers<[1], [1], [0], [0], [0, 0, 1, 0], [], []>} : vector<8x8xbf16>, vector<8x8xbf16>, vector<8x8xf32> -> vector<8x8xf32>
    %cst_8 = arith.constant 0.353553385 : f32
    %13 = vector.broadcast %cst_8 : f32 to vector<8x8xf32>
    %14 = arith.mulf %12, %13 : vector<8x8xf32>
    %cst_9 = arith.constant 0xFF800000 : f32
    %15 = vector.broadcast %cst_9 : f32 to vector<8x8xf32>
    %16 = arith.select %8, %14, %15 : vector<8x8xi1>, vector<8x8xf32>
    %cst_10 = arith.constant dense<0xFF800000> : vector<8xf32>
    %17 = vector.multi_reduction <maximumf>, %16, %cst_10 [1] : vector<8x8xf32> to vector<8xf32>
    %18 = vector.shape_cast %17 : vector<8xf32> to vector<8x1xf32>
    %19 = vector.broadcast %18 : vector<8x1xf32> to vector<8x8xf32>
    %20 = arith.subf %16, %19 : vector<8x8xf32>
    %21 = math.exp %20 : vector<8x8xf32>
    %cst_11 = arith.constant dense<0.000000e+00> : vector<8xf32>
    %22 = vector.multi_reduction <add>, %21, %cst_11 [1] : vector<8x8xf32> to vector<8xf32>
    %23 = vector.shape_cast %22 : vector<8xf32> to vector<8x1xf32>
    %24 = tpu.reciprocal %23 {approx = true} : vector<8x1xf32> -> vector<8x1xf32>
    %25 = vector.broadcast %24 : vector<8x1xf32> to vector<8x8xf32>
    %26 = arith.mulf %21, %25 : vector<8x8xf32>
    %27 = arith.truncf %26 : vector<8x8xf32> to vector<8x8xbf16>
    %cst_12 = arith.constant dense<0.000000e+00> : vector<8x8xf32>
    %28 = tpu.matmul %27, %11, %cst_12 {dimension_numbers = #tpu.dot_dimension_numbers<[1], [0], [0], [1], [0, 0, 1, 1], [], []>} : vector<8x8xbf16>, vector<8x8xbf16>, vector<8x8xf32> -> vector<8x8xf32>
    %29 = vector.extract_strided_slice %1 {offsets = [0, 8], sizes = [8, 8], strides = [1, 1]} : vector<8x32xbf16> to vector<8x8xbf16>
    %30 = vector.extract_strided_slice %3 {offsets = [0, 8], sizes = [8, 8], strides = [1, 1]} : vector<8x32xbf16> to vector<8x8xbf16>
    %31 = vector.extract_strided_slice %5 {offsets = [0, 8], sizes = [8, 8], strides = [1, 1]} : vector<8x32xbf16> to vector<8x8xbf16>
    %cst_13 = arith.constant dense<0.000000e+00> : vector<8x8xf32>
    %32 = tpu.matmul %29, %30, %cst_13 {dimension_numbers = #tpu.dot_dimension_numbers<[1], [1], [0], [0], [0, 0, 1, 0], [], []>} : vector<8x8xbf16>, vector<8x8xbf16>, vector<8x8xf32> -> vector<8x8xf32>
    %cst_14 = arith.constant 0.353553385 : f32
    %33 = vector.broadcast %cst_14 : f32 to vector<8x8xf32>
    %34 = arith.mulf %32, %33 : vector<8x8xf32>
    %cst_15 = arith.constant 0xFF800000 : f32
    %35 = vector.broadcast %cst_15 : f32 to vector<8x8xf32>
    %36 = arith.select %8, %34, %35 : vector<8x8xi1>, vector<8x8xf32>
    %cst_16 = arith.constant dense<0xFF800000> : vector<8xf32>
    %37 = vector.multi_reduction <maximumf>, %36, %cst_16 [1] : vector<8x8xf32> to vector<8xf32>
    %38 = vector.shape_cast %37 : vector<8xf32> to vector<8x1xf32>
    %39 = vector.broadcast %38 : vector<8x1xf32> to vector<8x8xf32>
    %40 = arith.subf %36, %39 : vector<8x8xf32>
    %41 = math.exp %40 : vector<8x8xf32>
    %cst_17 = arith.constant dense<0.000000e+00> : vector<8xf32>
    %42 = vector.multi_reduction <add>, %41, %cst_17 [1] : vector<8x8xf32> to vector<8xf32>
    %43 = vector.shape_cast %42 : vector<8xf32> to vector<8x1xf32>
    %44 = tpu.reciprocal %43 {approx = true} : vector<8x1xf32> -> vector<8x1xf32>
    %45 = vector.broadcast %44 : vector<8x1xf32> to vector<8x8xf32>
    %46 = arith.mulf %41, %45 : vector<8x8xf32>
    %47 = arith.truncf %46 : vector<8x8xf32> to vector<8x8xbf16>
    %cst_18 = arith.constant dense<0.000000e+00> : vector<8x8xf32>
    %48 = tpu.matmul %47, %31, %cst_18 {dimension_numbers = #tpu.dot_dimension_numbers<[1], [0], [0], [1], [0, 0, 1, 1], [], []>} : vector<8x8xbf16>, vector<8x8xbf16>, vector<8x8xf32> -> vector<8x8xf32>
    %49 = vector.extract_strided_slice %1 {offsets = [0, 16], sizes = [8, 8], strides = [1, 1]} : vector<8x32xbf16> to vector<8x8xbf16>
    %50 = vector.extract_strided_slice %3 {offsets = [0, 16], sizes = [8, 8], strides = [1, 1]} : vector<8x32xbf16> to vector<8x8xbf16>
    %51 = vector.extract_strided_slice %5 {offsets = [0, 16], sizes = [8, 8], strides = [1, 1]} : vector<8x32xbf16> to vector<8x8xbf16>
    %cst_19 = arith.constant dense<0.000000e+00> : vector<8x8xf32>
    %52 = tpu.matmul %49, %50, %cst_19 {dimension_numbers = #tpu.dot_dimension_numbers<[1], [1], [0], [0], [0, 0, 1, 0], [], []>} : vector<8x8xbf16>, vector<8x8xbf16>, vector<8x8xf32> -> vector<8x8xf32>
    %cst_20 = arith.constant 0.353553385 : f32
    %53 = vector.broadcast %cst_20 : f32 to vector<8x8xf32>
    %54 = arith.mulf %52, %53 : vector<8x8xf32>
    %cst_21 = arith.constant 0xFF800000 : f32
    %55 = vector.broadcast %cst_21 : f32 to vector<8x8xf32>
    %56 = arith.select %8, %54, %55 : vector<8x8xi1>, vector<8x8xf32>
    %cst_22 = arith.constant dense<0xFF800000> : vector<8xf32>
    %57 = vector.multi_reduction <maximumf>, %56, %cst_22 [1] : vector<8x8xf32> to vector<8xf32>
    %58 = vector.shape_cast %57 : vector<8xf32> to vector<8x1xf32>
    %59 = vector.broadcast %58 : vector<8x1xf32> to vector<8x8xf32>
    %60 = arith.subf %56, %59 : vector<8x8xf32>
    %61 = math.exp %60 : vector<8x8xf32>
    %cst_23 = arith.constant dense<0.000000e+00> : vector<8xf32>
    %62 = vector.multi_reduction <add>, %61, %cst_23 [1] : vector<8x8xf32> to vector<8xf32>
    %63 = vector.shape_cast %62 : vector<8xf32> to vector<8x1xf32>
    %64 = tpu.reciprocal %63 {approx = true} : vector<8x1xf32> -> vector<8x1xf32>
    %65 = vector.broadcast %64 : vector<8x1xf32> to vector<8x8xf32>
    %66 = arith.mulf %61, %65 : vector<8x8xf32>
    %67 = arith.truncf %66 : vector<8x8xf32> to vector<8x8xbf16>
    %cst_24 = arith.constant dense<0.000000e+00> : vector<8x8xf32>
    %68 = tpu.matmul %67, %51, %cst_24 {dimension_numbers = #tpu.dot_dimension_numbers<[1], [0], [0], [1], [0, 0, 1, 1], [], []>} : vector<8x8xbf16>, vector<8x8xbf16>, vector<8x8xf32> -> vector<8x8xf32>
    %69 = vector.extract_strided_slice %1 {offsets = [0, 24], sizes = [8, 8], strides = [1, 1]} : vector<8x32xbf16> to vector<8x8xbf16>
    %70 = vector.extract_strided_slice %3 {offsets = [0, 24], sizes = [8, 8], strides = [1, 1]} : vector<8x32xbf16> to vector<8x8xbf16>
    %71 = vector.extract_strided_slice %5 {offsets = [0, 24], sizes = [8, 8], strides = [1, 1]} : vector<8x32xbf16> to vector<8x8xbf16>
    %cst_25 = arith.constant dense<0.000000e+00> : vector<8x8xf32>
    %72 = tpu.matmul %69, %70, %cst_25 {dimension_numbers = #tpu.dot_dimension_numbers<[1], [1], [0], [0], [0, 0, 1, 0], [], []>} : vector<8x8xbf16>, vector<8x8xbf16>, vector<8x8xf32> -> vector<8x8xf32>
    %cst_26 = arith.constant 0.353553385 : f32
    %73 = vector.broadcast %cst_26 : f32 to vector<8x8xf32>
    %74 = arith.mulf %72, %73 : vector<8x8xf32>
    %cst_27 = arith.constant 0xFF800000 : f32
    %75 = vector.broadcast %cst_27 : f32 to vector<8x8xf32>
    %76 = arith.select %8, %74, %75 : vector<8x8xi1>, vector<8x8xf32>
    %cst_28 = arith.constant dense<0xFF800000> : vector<8xf32>
    %77 = vector.multi_reduction <maximumf>, %76, %cst_28 [1] : vector<8x8xf32> to vector<8xf32>
    %78 = vector.shape_cast %77 : vector<8xf32> to vector<8x1xf32>
    %79 = vector.broadcast %78 : vector<8x1xf32> to vector<8x8xf32>
    %80 = arith.subf %76, %79 : vector<8x8xf32>
    %81 = math.exp %80 : vector<8x8xf32>
    %cst_29 = arith.constant dense<0.000000e+00> : vector<8xf32>
    %82 = vector.multi_reduction <add>, %81, %cst_29 [1] : vector<8x8xf32> to vector<8xf32>
    %83 = vector.shape_cast %82 : vector<8xf32> to vector<8x1xf32>
    %84 = tpu.reciprocal %83 {approx = true} : vector<8x1xf32> -> vector<8x1xf32>
    %85 = vector.broadcast %84 : vector<8x1xf32> to vector<8x8xf32>
    %86 = arith.mulf %81, %85 : vector<8x8xf32>
    %87 = arith.truncf %86 : vector<8x8xf32> to vector<8x8xbf16>
    %cst_30 = arith.constant dense<0.000000e+00> : vector<8x8xf32>
    %88 = tpu.matmul %87, %71, %cst_30 {dimension_numbers = #tpu.dot_dimension_numbers<[1], [0], [0], [1], [0, 0, 1, 1], [], []>} : vector<8x8xbf16>, vector<8x8xbf16>, vector<8x8xf32> -> vector<8x8xf32>
    %89 = tpu.concatenate %28, %48, %68, %88 in 1 : vector<8x8xf32>, vector<8x8xf32>, vector<8x8xf32>, vector<8x8xf32> -> vector<8x32xf32>
    %90 = arith.truncf %89 : vector<8x32xf32> to vector<8x32xbf16>
    %c0_31 = arith.constant 0 : index
    %c0_32 = arith.constant 0 : index
    %91 = vector.load %arg5[%c0_31, %c0_32] : memref<32x32xbf16, #tpu.memory_space<vmem>>, vector<32x32xbf16>
    %cst_33 = arith.constant dense<0.000000e+00> : vector<8x32xf32>
    %92 = tpu.matmul %90, %91, %cst_33 {dimension_numbers = #tpu.dot_dimension_numbers<[1], [0], [0], [1], [0, 0, 1, 1], [], []>} : vector<8x32xbf16>, vector<32x32xbf16>, vector<8x32xf32> -> vector<8x32xf32>
    %c0_i32 = arith.constant 0 : i32
    %93 = arith.cmpi eq, %arg1, %c0_i32 : i32
    %94 = arith.extui %93 : i1 to i32
    %c0_i32_34 = arith.constant 0 : i32
    %95 = arith.cmpi ne, %94, %c0_i32_34 : i32
    scf.if %95 {
      %c0_37 = arith.constant 0 : index
      %c0_38 = arith.constant 0 : index
      %c0_39 = arith.constant 0 : index
      %99 = vector.load %arg7[%c0_37, %c0_38, %c0_39] : memref<1x8x32xf32, #tpu.memory_space<vmem>>, vector<1x8x32xf32>
      %100 = vector.shape_cast %99 : vector<1x8x32xf32> to vector<8x32xf32>
      %c0_40 = arith.constant 0 : index
      %c0_41 = arith.constant 0 : index
      %101 = vector.load %arg6[%c0_40, %c0_41] : memref<1x32xf32, #tpu.memory_space<vmem>>, vector<1x32xf32>
      %102 = vector.broadcast %101 : vector<1x32xf32> to vector<8x32xf32>
      %103 = arith.addf %100, %102 : vector<8x32xf32>
      %104 = arith.addf %103, %92 : vector<8x32xf32>
      %c0_42 = arith.constant 0 : index
      %c0_43 = arith.constant 0 : index
      %c0_44 = arith.constant 0 : index
      %105 = vector.load %arg8[%c0_42, %c0_43, %c0_44] : memref<1x8x32xf32, #tpu.memory_space<vmem>>, vector<1x8x32xf32>
      %106 = vector.shape_cast %105 : vector<1x8x32xf32> to vector<8x32xf32>
      %107 = vector.shape_cast %104 : vector<8x32xf32> to vector<1x8x32xf32>
      tpu.vector_store %arg8[%c0_42, %c0_43, %c0_44], %107 {strides = array<i32>} : memref<1x8x32xf32, #tpu.memory_space<vmem>>, vector<1x8x32xf32>,
    } else {
    }
    %c0_i32_35 = arith.constant 0 : i32
    %96 = arith.cmpi ne, %arg1, %c0_i32_35 : i32
    %97 = arith.extui %96 : i1 to i32
    %c0_i32_36 = arith.constant 0 : i32
    %98 = arith.cmpi ne, %97, %c0_i32_36 : i32
    scf.if %98 {
      %c0_37 = arith.constant 0 : index
      %c0_38 = arith.constant 0 : index
      %c0_39 = arith.constant 0 : index
      %99 = vector.load %arg8[%c0_37, %c0_38, %c0_39] : memref<1x8x32xf32, #tpu.memory_space<vmem>>, vector<1x8x32xf32>
      %100 = vector.shape_cast %99 : vector<1x8x32xf32> to vector<8x32xf32>
      %101 = arith.addf %100, %92 : vector<8x32xf32>
      %c0_40 = arith.constant 0 : index
      %c0_41 = arith.constant 0 : index
      %c0_42 = arith.constant 0 : index
      %102 = vector.load %arg8[%c0_40, %c0_41, %c0_42] : memref<1x8x32xf32, #tpu.memory_space<vmem>>, vector<1x8x32xf32>
      %103 = vector.shape_cast %102 : vector<1x8x32xf32> to vector<8x32xf32>
      %104 = vector.shape_cast %101 : vector<8x32xf32> to vector<1x8x32xf32>
      tpu.vector_store %arg8[%c0_40, %c0_41, %c0_42], %104 {strides = array<i32>} : memref<1x8x32xf32, #tpu.memory_space<vmem>>, vector<1x8x32xf32>,
    } else {
    }
    return
  }
  func.func @transform_0(%arg0: i32, %arg1: i32) -> (i32, i32, i32) {
    %c0_i32 = arith.constant 0 : i32
    %c0_i32_0 = arith.constant 0 : i32
    return %arg0, %c0_i32, %arg1 : i32, i32, i32
  }
  func.func @transform_1(%arg0: i32, %arg1: i32) -> (i32, i32, i32) {
    %c0_i32 = arith.constant 0 : i32
    %c0_i32_0 = arith.constant 0 : i32
    return %arg0, %c0_i32, %arg1 : i32, i32, i32
  }
  func.func @transform_2(%arg0: i32, %arg1: i32) -> (i32, i32, i32) {
    %c0_i32 = arith.constant 0 : i32
    %c0_i32_0 = arith.constant 0 : i32
    return %arg0, %c0_i32, %arg1 : i32, i32, i32
  }
  func.func @transform_3(%arg0: i32, %arg1: i32) -> (i32, i32) {
    %c0_i32 = arith.constant 0 : i32
    %c0_i32_0 = arith.constant 0 : i32
    return %arg1, %c0_i32 : i32, i32
  }
  func.func @transform_4(%arg0: i32, %arg1: i32) -> (i32, i32) {
    %c0_i32 = arith.constant 0 : i32
    %c0_i32_0 = arith.constant 0 : i32
    %c0_i32_1 = arith.constant 0 : i32
    return %c0_i32, %c0_i32_0 : i32, i32
  }
  func.func @transform_5(%arg0: i32, %arg1: i32) -> (i32, i32, i32) {
    %c0_i32 = arith.constant 0 : i32
    %c0_i32_0 = arith.constant 0 : i32
    %c0_i32_1 = arith.constant 0 : i32
    return %arg0, %c0_i32, %c0_i32_0 : i32, i32, i32
  }
  func.func @transform_6(%arg0: i32, %arg1: i32) -> (i32, i32, i32) {
    %c0_i32 = arith.constant 0 : i32
    %c0_i32_0 = arith.constant 0 : i32
    %c0_i32_1 = arith.constant 0 : i32
    return %arg0, %c0_i32, %c0_i32_0 : i32, i32, i32
  }
}

module attributes {stable_mosaic.version = 11 : i64} {
  func.func @_ln_lm_head_kernel(%arg0: i32, %arg1: i32, %arg2: memref<16x32xf32, #tpu.memory_space<vmem>>, %arg3: memref<1x32xf32, #tpu.memory_space<vmem>>, %arg4: memref<1x32xf32, #tpu.memory_space<vmem>>, %arg5: memref<32x128xbf16, #tpu.memory_space<vmem>>, %arg6: memref<16x128xf32, #tpu.memory_space<vmem>>) attributes {dimension_semantics = [#tpu.dimension_semantics<parallel>, #tpu.dimension_semantics<parallel>], iteration_bounds = array<i64: 1, 1>, scalar_prefetch = 0 : i64, scratch_operands = 0 : i64, tpu.core_type = #tpu.core_type<tc>, window_params = [{transform_indices = @transform_0, window_bounds = array<i64: 16, 32>}, {pipeline_mode = #tpu.pipeline_mode<synchronous>, transform_indices = @transform_1, window_bounds = array<i64: 1, 32>}, {pipeline_mode = #tpu.pipeline_mode<synchronous>, transform_indices = @transform_2, window_bounds = array<i64: 1, 32>}, {transform_indices = @transform_3, window_bounds = array<i64: 32, 128>}, {transform_indices = @transform_4, window_bounds = array<i64: 16, 128>}]} {
    %c0 = arith.constant 0 : index
    %c0_0 = arith.constant 0 : index
    %0 = vector.load %arg2[%c0, %c0_0] : memref<16x32xf32, #tpu.memory_space<vmem>>, vector<16x32xf32>
    %c0_1 = arith.constant 0 : index
    %c0_2 = arith.constant 0 : index
    %1 = vector.load %arg3[%c0_1, %c0_2] : memref<1x32xf32, #tpu.memory_space<vmem>>, vector<1x32xf32>
    %c0_3 = arith.constant 0 : index
    %c0_4 = arith.constant 0 : index
    %2 = vector.load %arg4[%c0_3, %c0_4] : memref<1x32xf32, #tpu.memory_space<vmem>>, vector<1x32xf32>
    %cst = arith.constant dense<0.000000e+00> : vector<16xf32>
    %3 = vector.multi_reduction <add>, %0, %cst [1] : vector<16x32xf32> to vector<16xf32>
    %4 = vector.shape_cast %3 : vector<16xf32> to vector<16x1xf32>
    %cst_5 = arith.constant 3.200000e+01 : f32
    %5 = vector.broadcast %cst_5 : f32 to vector<16x1xf32>
    %6 = arith.divf %4, %5 : vector<16x1xf32>
    %7 = vector.broadcast %6 : vector<16x1xf32> to vector<16x32xf32>
    %8 = arith.subf %0, %7 : vector<16x32xf32>
    %9 = arith.mulf %8, %8 : vector<16x32xf32>
    %cst_6 = arith.constant dense<0.000000e+00> : vector<16xf32>
    %10 = vector.multi_reduction <add>, %9, %cst_6 [1] : vector<16x32xf32> to vector<16xf32>
    %11 = vector.shape_cast %10 : vector<16xf32> to vector<16x1xf32>
    %cst_7 = arith.constant 3.200000e+01 : f32
    %12 = vector.broadcast %cst_7 : f32 to vector<16x1xf32>
    %13 = arith.divf %11, %12 : vector<16x1xf32>
    %14 = vector.broadcast %6 : vector<16x1xf32> to vector<16x32xf32>
    %15 = arith.subf %0, %14 : vector<16x32xf32>
    %cst_8 = arith.constant 9.99999974E-6 : f32
    %16 = vector.broadcast %cst_8 : f32 to vector<16x1xf32>
    %17 = arith.addf %13, %16 : vector<16x1xf32>
    %18 = math.rsqrt %17 : vector<16x1xf32>
    %19 = vector.broadcast %18 : vector<16x1xf32> to vector<16x32xf32>
    %20 = arith.mulf %15, %19 : vector<16x32xf32>
    %21 = vector.broadcast %1 : vector<1x32xf32> to vector<16x32xf32>
    %22 = arith.mulf %20, %21 : vector<16x32xf32>
    %23 = vector.broadcast %2 : vector<1x32xf32> to vector<16x32xf32>
    %24 = arith.addf %22, %23 : vector<16x32xf32>
    %25 = arith.truncf %24 : vector<16x32xf32> to vector<16x32xbf16>
    %c0_9 = arith.constant 0 : index
    %c0_10 = arith.constant 0 : index
    %26 = vector.load %arg5[%c0_9, %c0_10] : memref<32x128xbf16, #tpu.memory_space<vmem>>, vector<32x128xbf16>
    %cst_11 = arith.constant dense<0.000000e+00> : vector<16x128xf32>
    %27 = tpu.matmul %25, %26, %cst_11 {dimension_numbers = #tpu.dot_dimension_numbers<[1], [0], [0], [1], [0, 0, 1, 1], [], []>} : vector<16x32xbf16>, vector<32x128xbf16>, vector<16x128xf32> -> vector<16x128xf32>
    %c0_12 = arith.constant 0 : index
    %c0_13 = arith.constant 0 : index
    %28 = vector.load %arg6[%c0_12, %c0_13] : memref<16x128xf32, #tpu.memory_space<vmem>>, vector<16x128xf32>
    tpu.vector_store %arg6[%c0_12, %c0_13], %27 {strides = array<i32>} : memref<16x128xf32, #tpu.memory_space<vmem>>, vector<16x128xf32>,
    return
  }
  func.func @transform_0(%arg0: i32, %arg1: i32) -> (i32, i32) {
    %c0_i32 = arith.constant 0 : i32
    %c0_i32_0 = arith.constant 0 : i32
    return %arg0, %c0_i32 : i32, i32
  }
  func.func @transform_1(%arg0: i32, %arg1: i32) -> (i32, i32) {
    %c0_i32 = arith.constant 0 : i32
    %c0_i32_0 = arith.constant 0 : i32
    %c0_i32_1 = arith.constant 0 : i32
    return %c0_i32, %c0_i32_0 : i32, i32
  }
  func.func @transform_2(%arg0: i32, %arg1: i32) -> (i32, i32) {
    %c0_i32 = arith.constant 0 : i32
    %c0_i32_0 = arith.constant 0 : i32
    %c0_i32_1 = arith.constant 0 : i32
    return %c0_i32, %c0_i32_0 : i32, i32
  }
  func.func @transform_3(%arg0: i32, %arg1: i32) -> (i32, i32) {
    %c0_i32 = arith.constant 0 : i32
    %c0_i32_0 = arith.constant 0 : i32
    return %c0_i32, %arg1 : i32, i32
  }
  func.func @transform_4(%arg0: i32, %arg1: i32) -> (i32, i32) {
    %c0_i32 = arith.constant 0 : i32
    return %arg0, %arg1 : i32, i32
  }
}

</mosaic_0001>

<llo_original>
// kernel: _lambda_.7
$region0: #{_lambda_.7}
  #allocation0 [shape = 'u32[]', space=smem, size = 0x4, offset = 0x4, fixed_abs, tag = 'smem constant byte address 0x4 - core index']
  #allocation1 [shape = 'u32[144,128]{1,0:T(1,128)}', space=vmem, size = 0x12000, scoped, tag = 'internal scratch']
  %s0 = inlined_call_operand.vmem [shape: f32[16,32], index: 0, kind: input, shape index: {}]
  %s1 = inlined_call_operand.vmem [shape: f32[1,32], index: 1, kind: input, shape index: {}]
  %s2 = inlined_call_operand.vmem [shape: f32[1,32], index: 2, kind: input, shape index: {}]
  %s3 = inlined_call_operand.vmem [shape: bf16[32,96], index: 3, kind: input, shape index: {}]
  %s4 = inlined_call_operand.vmem [shape: bf16[16,32], index: 4, kind: output, shape index: {0}]
  %s5 = inlined_call_operand.vmem [shape: bf16[16,32], index: 5, kind: output, shape index: {1}]
  %s6 = inlined_call_operand.vmem [shape: bf16[16,32], index: 6, kind: output, shape index: {2}]
  %7 = xla_tuple %s4, %s5, %s6
  %s8 = sld [smem:[#allocation0]]
  $region42: #{_lambda_.7} parent=0
    _
  %s10 = ssub.s32 1, %s8
  %s11 = scalar_select 0, %s10, %s8
  // Predicated region
  $region2: #{_lambda_.7} parent=0 // pred_check
    _
  $region3: #{_lambda_.7} parent=0 // pred_check_branch
    %13 = sbr.rel (0) target = $region5
  $region4: #{_lambda_.7} parent=0 // pred_region
    _
  $region5: #{_lambda_.7} parent=0 // pred_fallthru
    _
  // Predicated region
  $region6: #{_lambda_.7} parent=0 // pred_check
    _
  $region7: #{_lambda_.7} parent=0 // pred_check_branch
    %15 = sbr.rel (0) target = $region9
  $region8: #{_lambda_.7} parent=0 // pred_region
    _
  $region9: #{_lambda_.7} parent=0 // pred_fallthru
    _
  // Predicated region
  $region10: #{_lambda_.7} parent=0 // pred_check
    _
  $region11: #{_lambda_.7} parent=0 // pred_check_branch
    %17 = sbr.rel (0) target = $region13
  $region12: #{_lambda_.7} parent=0 // pred_region
    _
  $region13: #{_lambda_.7} parent=0 // pred_fallthru
    _
  // Predicated region
  $region14: #{_lambda_.7} parent=0 // pred_check
    _
  $region15: #{_lambda_.7} parent=0 // pred_check_branch
    %19 = sbr.rel (0) target = $region17
  $region16: #{_lambda_.7} parent=0 // pred_region
    _
  $region17: #{_lambda_.7} parent=0 // pred_fallthru
    _
  %v21 = vld [vmem:[%s0] sm:$0xff]
  %v22 = vld [vmem:[%s0 + $0x8] sm:$0xff]
  %v23 = vld [vmem:[%s1] sm:$0x1]
  %v24 = vld [vmem:[%s2] sm:$0x1]
  %vm25 = vcmask 261120
  %v26 = vsel %vm25, %v21, 0.0
  %27 = vadd.xlane.f32.xlu0 %v26
  %v28 = vpop.xlane.xlu0 %27
  %v29 = vsel %vm25, %v22, 0.0
  %30 = vadd.xlane.f32.xlu0 %v29
  %v31 = vpop.xlane.xlu0 %30
  %v32 = vrcp.pop 32.0
  %v33 = vmul.f32 %v28, %v32
  %v34 = vmul.f32 %v31, %v32
  %v35 = vsub.f32 %v21, %v33
  %v36 = vsub.f32 %v22, %v34
  %v37 = vmul.f32 %v35, %v35
  %v38 = vmul.f32 %v36, %v36
  %v39 = vsel %vm25, %v37, 0.0
  %40 = vadd.xlane.f32.xlu0 %v39
  %v41 = vpop.xlane.xlu0 %40
  %v42 = vsel %vm25, %v38, 0.0
  %43 = vadd.xlane.f32.xlu0 %v42
  %v44 = vpop.xlane.xlu0 %43
  %v45 = vmul.f32 %v41, %v32
  %v46 = vmul.f32 %v44, %v32
  %v47 = vadd.f32 %v45, 1e-05
  %v48 = vadd.f32 %v46, 1e-05
  %v49 = vrsqrt.pop %v47
  %v50 = vrsqrt.pop %v48
  %v51 = vmul.f32 %v35, %v49
  %v52 = vmul.f32 %v36, %v50
  %v54 = vlaneseq
  %v55 = vshrl.u32 %v54, 7
  %v56 = vsub.s32 0, %v55
  %v57 = vrot.slane %v23, %v56
  %v59 = vmul.f32 %v51, %v57
  %v60 = vmul.f32 %v52, %v57
  %v62 = vlaneseq
  %v63 = vshrl.u32 %v62, 7
  %v64 = vsub.s32 0, %v63
  %v65 = vrot.slane %v24, %v64
  %v67 = vadd.f32 %v59, %v65
  %v68 = vadd.f32 %v60, %v65
  %v69 = vpack.c.bf16 %v68, %v67
  %v70 = vld [vmem:[%s3] sm:$0xf]
  %v71 = vld [vmem:[%s3 + $0x4] sm:$0xf]
  %v72 = vld [vmem:[%s3 + $0x8] sm:$0xf]
  %v73 = vld [vmem:[%s3 + $0xc] sm:$0xf]
  %v78 = vunpack.c.l.b16 %v70
  %v79 = vunpack.c.l.b16 %v71
  %v80 = vunpack.c.l.b16 %v72
  %v81 = vunpack.c.l.b16 %v73
  %v82 = vpack.c.b16 %v79, %v78
  %v83 = vpack.c.b16 %v81, %v80
  %v87 = vsel %vm25, %v69, 0
  %89 = vmatprep.subr.bf16.mxu0 0
  %90 = vmatpush1.bf16.msra.mxu0 0
  %91 = vmatprep.subr.bf16.mxu0 0
  %92 = vmatpush1.bf16.msra.mxu0 0
  %93 = vmatprep.subr.bf16.mxu0 0
  %94 = vmatpush1.bf16.msra.mxu0 0
  %95 = vmatprep.subr.bf16.mxu0 0
  %96 = vmatpush1.bf16.msra.mxu0 0
  %97 = vmatprep.subr.bf16.mxu0 0
  %98 = vmatpush1.bf16.msra.mxu0 0
  %99 = vmatprep.subr.bf16.mxu0 0
  %100 = vmatpush1.bf16.msra.mxu0 0
  %101 = vmatprep.subr.bf16.mxu0 0
  %102 = vmatpush1.bf16.msra.mxu0 %v83
  %103 = vmatprep.subr.bf16.mxu0 0
  %104 = vmatpush1.bf16.msra.mxu0 %v82
  %105 = vmatprep.subr.bf16.mxu0 0
  %106 = vmatpush2.bf16.msra.mxu0 0
  %107 = vmatprep.subr.bf16.mxu0 0
  %108 = vmatpush2.bf16.msra.mxu0 0
  %109 = vmatprep.subr.bf16.mxu0 0
  %110 = vmatpush2.bf16.msra.mxu0 0
  %111 = vmatprep.subr.bf16.mxu0 0
  %112 = vmatpush2.bf16.msra.mxu0 0
  %113 = vmatprep.subr.bf16.mxu0 0
  %114 = vmatpush2.bf16.msra.mxu0 0
  %115 = vmatprep.subr.bf16.mxu0 0
  %116 = vmatpush2.bf16.msra.mxu0 0
  %117 = vmatprep.subr.bf16.mxu0 0
  %118 = vmatpush2.bf16.msra.mxu0 0
  %119 = vmatprep.subr.bf16.mxu0 0
  %120 = vmatpush2.bf16.msra.mxu0 0
  %121 = vmatprep.mubr.bf16.mxu0 0
  %122 = vmatmul.mubr.bf16.gmra.mxu0 %v87
  %v123 = vpop.f32.mrf.mxu0
  %v124 = vadd.f32 0.0, %v123
  %v125 = vpop.f32.mrf.mxu0
  %v126 = vpop.f32.mrf.mxu0
  %v127 = vadd.f32 0.0, %v126
  %v128 = vpop.f32.mrf.mxu0
  %129 = vdwg.mxu0
  %v130 = vpack.c.bf16 %v127, %v124
  %v132 = vunpack.c.l.b16 %v130
  %v133 = vunpack.c.h.b16 %v130
  %v134 = vpack.c.b16 %v132, %v132
  %v135 = vpack.c.b16 %v133, %v133
  %vm138 = vcmask 257024
  %139 = vst.msk [vmem:[%s4] sm:$0xf] %vm138, %v134
  %140 = vst.msk [vmem:[%s4 + $0x4] sm:$0xf] %vm138, %v135
  %141 = vrot.lane.b32.xlu0 %v134, 96
  %v142 = vpop.permute.xlu0 %141
  %143 = vrot.lane.b32.xlu0 %v135, 96
  %v144 = vpop.permute.xlu0 %143
  %147 = vst.msk [vmem:[%s5] sm:$0xf] %vm138, %v142
  %148 = vst.msk [vmem:[%s5 + $0x4] sm:$0xf] %vm138, %v144
  %149 = vrot.lane.b32.xlu0 %v134, 64
  %v150 = vpop.permute.xlu0 %149
  %151 = vrot.lane.b32.xlu0 %v135, 64
  %v152 = vpop.permute.xlu0 %151
  %155 = vst.msk [vmem:[%s6] sm:$0xf] %vm138, %v150
  %156 = vst.msk [vmem:[%s6 + $0x4] sm:$0xf] %vm138, %v152
  // Predicated region
  $region18: #{_lambda_.7} parent=0 // pred_check
    _
  $region19: #{_lambda_.7} parent=0 // pred_check_branch
    %158 = sbr.rel (0) target = $region21
  $region20: #{_lambda_.7} parent=0 // pred_region
    _
  $region21: #{_lambda_.7} parent=0 // pred_fallthru
    _
  // Predicated region
  $region22: #{_lambda_.7} parent=0 // pred_check
    _
  $region23: #{_lambda_.7} parent=0 // pred_check_branch
    %160 = sbr.rel (0) target = $region25
  $region24: #{_lambda_.7} parent=0 // pred_region
    _
  $region25: #{_lambda_.7} parent=0 // pred_fallthru
    _
  // Predicated region
  $region26: #{_lambda_.7} parent=0 // pred_check
    _
  $region27: #{_lambda_.7} parent=0 // pred_check_branch
    %162 = sbr.rel (0) target = $region29
  $region28: #{_lambda_.7} parent=0 // pred_region
    _
  $region29: #{_lambda_.7} parent=0 // pred_fallthru
    _
  // Predicated region
  $region30: #{_lambda_.7} parent=0 // pred_check
    _
  $region31: #{_lambda_.7} parent=0 // pred_check_branch
    %164 = sbr.rel (0) target = $region33
  $region32: #{_lambda_.7} parent=0 // pred_region
    _
  $region33: #{_lambda_.7} parent=0 // pred_fallthru
    _
  // Predicated region
  $region34: #{_lambda_.7} parent=0 // pred_check
    _
  $region35: #{_lambda_.7} parent=0 // pred_check_branch
    %166 = sbr.rel (0) target = $region37
  $region36: #{_lambda_.7} parent=0 // pred_region
    _
  $region37: #{_lambda_.7} parent=0 // pred_fallthru
    _
  // Predicated region
  $region38: #{_lambda_.7} parent=0 // pred_check
    _
  $region39: #{_lambda_.7} parent=0 // pred_check_branch
    %168 = sbr.rel (0) target = $region41
  $region40: #{_lambda_.7} parent=0 // pred_region
    _
  $region41: #{_lambda_.7} parent=0 // pred_fallthru
    _

// kernel: _lambda_.13
$region0: #{_lambda_.13}
  #allocation0 [shape = 'u32[]', space=smem, size = 0x4, offset = 0x4, fixed_abs, tag = 'smem constant byte address 0x4 - core index']
  #allocation1 [shape = 'u32[144,128]{1,0:T(1,128)}', space=vmem, size = 0x12000, scoped, tag = 'internal scratch']
  %s0 = inlined_call_operand.vmem [shape: f32[16,32], index: 0, kind: input, shape index: {}]
  %s1 = inlined_call_operand.vmem [shape: f32[1,32], index: 1, kind: input, shape index: {}]
  %s2 = inlined_call_operand.vmem [shape: f32[1,32], index: 2, kind: input, shape index: {}]
  %s3 = inlined_call_operand.vmem [shape: bf16[32,128], index: 3, kind: input, shape index: {}]
  %s4 = inlined_call_operand.vmem [shape: f32[16,128], index: 4, kind: output, shape index: {}]
  %s5 = sld [smem:[#allocation0]]
  $region26: #{_lambda_.13} parent=0
    _
  %s7 = ssub.s32 1, %s5
  %s8 = scalar_select 0, %s7, %s5
  // Predicated region
  $region2: #{_lambda_.13} parent=0 // pred_check
    _
  $region3: #{_lambda_.13} parent=0 // pred_check_branch
    %10 = sbr.rel (0) target = $region5
  $region4: #{_lambda_.13} parent=0 // pred_region
    _
  $region5: #{_lambda_.13} parent=0 // pred_fallthru
    _
  // Predicated region
  $region6: #{_lambda_.13} parent=0 // pred_check
    _
  $region7: #{_lambda_.13} parent=0 // pred_check_branch
    %12 = sbr.rel (0) target = $region9
  $region8: #{_lambda_.13} parent=0 // pred_region
    _
  $region9: #{_lambda_.13} parent=0 // pred_fallthru
    _
  // Predicated region
  $region10: #{_lambda_.13} parent=0 // pred_check
    _
  $region11: #{_lambda_.13} parent=0 // pred_check_branch
    %14 = sbr.rel (0) target = $region13
  $region12: #{_lambda_.13} parent=0 // pred_region
    _
  $region13: #{_lambda_.13} parent=0 // pred_fallthru
    _
  // Predicated region
  $region14: #{_lambda_.13} parent=0 // pred_check
    _
  $region15: #{_lambda_.13} parent=0 // pred_check_branch
    %16 = sbr.rel (0) target = $region17
  $region16: #{_lambda_.13} parent=0 // pred_region
    _
  $region17: #{_lambda_.13} parent=0 // pred_fallthru
    _
  %v18 = vld [vmem:[%s0] sm:$0xff]
  %v19 = vld [vmem:[%s0 + $0x8] sm:$0xff]
  %v20 = vld [vmem:[%s1] sm:$0x1]
  %v21 = vld [vmem:[%s2] sm:$0x1]
  %vm22 = vcmask 261120
  %v23 = vsel %vm22, %v18, 0.0
  %24 = vadd.xlane.f32.xlu0 %v23
  %v25 = vpop.xlane.xlu0 %24
  %v26 = vsel %vm22, %v19, 0.0
  %27 = vadd.xlane.f32.xlu0 %v26
  %v28 = vpop.xlane.xlu0 %27
  %v29 = vrcp.pop 32.0
  %v30 = vmul.f32 %v25, %v29
  %v31 = vmul.f32 %v28, %v29
  %v32 = vsub.f32 %v18, %v30
  %v33 = vsub.f32 %v19, %v31
  %v34 = vmul.f32 %v32, %v32
  %v35 = vmul.f32 %v33, %v33
  %v36 = vsel %vm22, %v34, 0.0
  %37 = vadd.xlane.f32.xlu0 %v36
  %v38 = vpop.xlane.xlu0 %37
  %v39 = vsel %vm22, %v35, 0.0
  %40 = vadd.xlane.f32.xlu0 %v39
  %v41 = vpop.xlane.xlu0 %40
  %v42 = vmul.f32 %v38, %v29
  %v43 = vmul.f32 %v41, %v29
  %v44 = vadd.f32 %v42, 1e-05
  %v45 = vadd.f32 %v43, 1e-05
  %v46 = vrsqrt.pop %v44
  %v47 = vrsqrt.pop %v45
  %v48 = vmul.f32 %v32, %v46
  %v49 = vmul.f32 %v33, %v47
  %v51 = vlaneseq
  %v52 = vshrl.u32 %v51, 7
  %v53 = vsub.s32 0, %v52
  %v54 = vrot.slane %v20, %v53
  %v56 = vmul.f32 %v48, %v54
  %v57 = vmul.f32 %v49, %v54
  %v59 = vlaneseq
  %v60 = vshrl.u32 %v59, 7
  %v61 = vsub.s32 0, %v60
  %v62 = vrot.slane %v21, %v61
  %v64 = vadd.f32 %v56, %v62
  %v65 = vadd.f32 %v57, %v62
  %v66 = vpack.c.bf16 %v65, %v64
  %v67 = vld [vmem:[%s3] sm:$0xf]
  %v68 = vld [vmem:[%s3 + $0x4] sm:$0xf]
  %v69 = vld [vmem:[%s3 + $0x8] sm:$0xf]
  %v70 = vld [vmem:[%s3 + $0xc] sm:$0xf]
  %v75 = vunpack.c.l.b16 %v67
  %v76 = vunpack.c.l.b16 %v68
  %v77 = vunpack.c.l.b16 %v69
  %v78 = vunpack.c.l.b16 %v70
  %v79 = vpack.c.b16 %v76, %v75
  %v80 = vpack.c.b16 %v78, %v77
  %v84 = vsel %vm22, %v66, 0
  %86 = vmatprep.subr.bf16.mxu0 0
  %87 = vmatpush1.bf16.msra.mxu0 0
  %88 = vmatprep.subr.bf16.mxu0 0
  %89 = vmatpush1.bf16.msra.mxu0 0
  %90 = vmatprep.subr.bf16.mxu0 0
  %91 = vmatpush1.bf16.msra.mxu0 0
  %92 = vmatprep.subr.bf16.mxu0 0
  %93 = vmatpush1.bf16.msra.mxu0 0
  %94 = vmatprep.subr.bf16.mxu0 0
  %95 = vmatpush1.bf16.msra.mxu0 0
  %96 = vmatprep.subr.bf16.mxu0 0
  %97 = vmatpush1.bf16.msra.mxu0 0
  %98 = vmatprep.subr.bf16.mxu0 0
  %99 = vmatpush1.bf16.msra.mxu0 %v80
  %100 = vmatprep.subr.bf16.mxu0 0
  %101 = vmatpush1.bf16.msra.mxu0 %v79
  %102 = vmatprep.subr.bf16.mxu0 0
  %103 = vmatpush2.bf16.msra.mxu0 0
  %104 = vmatprep.subr.bf16.mxu0 0
  %105 = vmatpush2.bf16.msra.mxu0 0
  %106 = vmatprep.subr.bf16.mxu0 0
  %107 = vmatpush2.bf16.msra.mxu0 0
  %108 = vmatprep.subr.bf16.mxu0 0
  %109 = vmatpush2.bf16.msra.mxu0 0
  %110 = vmatprep.subr.bf16.mxu0 0
  %111 = vmatpush2.bf16.msra.mxu0 0
  %112 = vmatprep.subr.bf16.mxu0 0
  %113 = vmatpush2.bf16.msra.mxu0 0
  %114 = vmatprep.subr.bf16.mxu0 0
  %115 = vmatpush2.bf16.msra.mxu0 0
  %116 = vmatprep.subr.bf16.mxu0 0
  %117 = vmatpush2.bf16.msra.mxu0 0
  %118 = vmatprep.mubr.bf16.mxu0 0
  %119 = vmatmul.mubr.bf16.gmra.mxu0 %v84
  %v120 = vpop.f32.mrf.mxu0
  %v121 = vadd.f32 0.0, %v120
  %v122 = vpop.f32.mrf.mxu0
  %v123 = vpop.f32.mrf.mxu0
  %v124 = vadd.f32 0.0, %v123
  %v125 = vpop.f32.mrf.mxu0
  %126 = vdwg.mxu0
  %127 = vst [vmem:[%s4] sm:$0xff] %v121
  %128 = vst [vmem:[%s4 + $0x8] sm:$0xff] %v124
  // Predicated region
  $region18: #{_lambda_.13} parent=0 // pred_check
    _
  $region19: #{_lambda_.13} parent=0 // pred_check_branch
    %130 = sbr.rel (0) target = $region21
  $region20: #{_lambda_.13} parent=0 // pred_region
    _
  $region21: #{_lambda_.13} parent=0 // pred_fallthru
    _
  // Predicated region
  $region22: #{_lambda_.13} parent=0 // pred_check
    _
  $region23: #{_lambda_.13} parent=0 // pred_check_branch
    %132 = sbr.rel (0) target = $region25
  $region24: #{_lambda_.13} parent=0 // pred_region
    _
  $region25: #{_lambda_.13} parent=0 // pred_fallthru
    _

// kernel: _lambda_.9
$region0: #{_lambda_.9}
  #allocation0 [shape = 'u32[]', space=smem, size = 0x4, offset = 0x4, fixed_abs, tag = 'smem constant byte address 0x4 - core index']
  #allocation1 [shape = 'u32[144,128]{1,0:T(1,128)}', space=vmem, size = 0x12000, scoped, tag = 'internal scratch']
  %s0 = inlined_call_operand.vmem [shape: f32[16,32], index: 0, kind: input, shape index: {}]
  %s1 = inlined_call_operand.vmem [shape: f32[1,32], index: 1, kind: input, shape index: {}]
  %s2 = inlined_call_operand.vmem [shape: f32[1,32], index: 2, kind: input, shape index: {}]
  %s3 = inlined_call_operand.vmem [shape: bf16[32,128], index: 3, kind: input, shape index: {}]
  %s4 = inlined_call_operand.vmem [shape: f32[1,128], index: 4, kind: input, shape index: {}]
  %s5 = inlined_call_operand.vmem [shape: bf16[128,32], index: 5, kind: input, shape index: {}]
  %s6 = inlined_call_operand.vmem [shape: f32[1,32], index: 6, kind: input, shape index: {}]
  %s7 = inlined_call_operand.vmem [shape: f32[16,32], index: 7, kind: output, shape index: {}]
  %s8 = sld [smem:[#allocation0]]
  $region38: #{_lambda_.9} parent=0
    _
  %s10 = ssub.s32 1, %s8
  %s11 = scalar_select 0, %s10, %s8
  // Predicated region
  $region2: #{_lambda_.9} parent=0 // pred_check
    _
  $region3: #{_lambda_.9} parent=0 // pred_check_branch
    %13 = sbr.rel (0) target = $region5
  $region4: #{_lambda_.9} parent=0 // pred_region
    _
  $region5: #{_lambda_.9} parent=0 // pred_fallthru
    _
  // Predicated region
  $region6: #{_lambda_.9} parent=0 // pred_check
    _
  $region7: #{_lambda_.9} parent=0 // pred_check_branch
    %15 = sbr.rel (0) target = $region9
  $region8: #{_lambda_.9} parent=0 // pred_region
    _
  $region9: #{_lambda_.9} parent=0 // pred_fallthru
    _
  // Predicated region
  $region10: #{_lambda_.9} parent=0 // pred_check
    _
  $region11: #{_lambda_.9} parent=0 // pred_check_branch
    %17 = sbr.rel (0) target = $region13
  $region12: #{_lambda_.9} parent=0 // pred_region
    _
  $region13: #{_lambda_.9} parent=0 // pred_fallthru
    _
  // Predicated region
  $region14: #{_lambda_.9} parent=0 // pred_check
    _
  $region15: #{_lambda_.9} parent=0 // pred_check_branch
    %19 = sbr.rel (0) target = $region17
  $region16: #{_lambda_.9} parent=0 // pred_region
    _
  $region17: #{_lambda_.9} parent=0 // pred_fallthru
    _
  // Predicated region
  $region18: #{_lambda_.9} parent=0 // pred_check
    _
  $region19: #{_lambda_.9} parent=0 // pred_check_branch
    %21 = sbr.rel (0) target = $region21
  $region20: #{_lambda_.9} parent=0 // pred_region
    _
  $region21: #{_lambda_.9} parent=0 // pred_fallthru
    _
  // Predicated region
  $region22: #{_lambda_.9} parent=0 // pred_check
    _
  $region23: #{_lambda_.9} parent=0 // pred_check_branch
    %23 = sbr.rel (0) target = $region25
  $region24: #{_lambda_.9} parent=0 // pred_region
    _
  $region25: #{_lambda_.9} parent=0 // pred_fallthru
    _
  // Predicated region
  $region26: #{_lambda_.9} parent=0 // pred_check
    _
  $region27: #{_lambda_.9} parent=0 // pred_check_branch
    %25 = sbr.rel (0) target = $region29
  $region28: #{_lambda_.9} parent=0 // pred_region
    _
  $region29: #{_lambda_.9} parent=0 // pred_fallthru
    _
  %v27 = vld [vmem:[%s0] sm:$0xff]
  %v28 = vld [vmem:[%s0 + $0x8] sm:$0xff]
  %v29 = vld [vmem:[%s1] sm:$0x1]
  %v30 = vld [vmem:[%s2] sm:$0x1]
  %vm31 = vcmask 261120
  %v32 = vsel %vm31, %v27, 0.0
  %33 = vadd.xlane.f32.xlu0 %v32
  %v34 = vpop.xlane.xlu0 %33
  %v35 = vsel %vm31, %v28, 0.0
  %36 = vadd.xlane.f32.xlu0 %v35
  %v37 = vpop.xlane.xlu0 %36
  %v38 = vrcp.pop 32.0
  %v39 = vmul.f32 %v34, %v38
  %v40 = vmul.f32 %v37, %v38
  %v41 = vsub.f32 %v27, %v39
  %v42 = vsub.f32 %v28, %v40
  %v43 = vmul.f32 %v41, %v41
  %v44 = vmul.f32 %v42, %v42
  %v45 = vsel %vm31, %v43, 0.0
  %46 = vadd.xlane.f32.xlu0 %v45
  %v47 = vpop.xlane.xlu0 %46
  %v48 = vsel %vm31, %v44, 0.0
  %49 = vadd.xlane.f32.xlu0 %v48
  %v50 = vpop.xlane.xlu0 %49
  %v51 = vmul.f32 %v47, %v38
  %v52 = vmul.f32 %v50, %v38
  %v53 = vadd.f32 %v51, 1e-05
  %v54 = vadd.f32 %v52, 1e-05
  %v55 = vrsqrt.pop %v53
  %v56 = vrsqrt.pop %v54
  %v57 = vmul.f32 %v41, %v55
  %v58 = vmul.f32 %v42, %v56
  %v60 = vlaneseq
  %v61 = vshrl.u32 %v60, 7
  %v62 = vsub.s32 0, %v61
  %v63 = vrot.slane %v29, %v62
  %v65 = vmul.f32 %v57, %v63
  %v66 = vmul.f32 %v58, %v63
  %v68 = vlaneseq
  %v69 = vshrl.u32 %v68, 7
  %v70 = vsub.s32 0, %v69
  %v71 = vrot.slane %v30, %v70
  %v73 = vadd.f32 %v65, %v71
  %v74 = vadd.f32 %v66, %v71
  %v75 = vpack.c.bf16 %v74, %v73
  %v76 = vld [vmem:[%s3] sm:$0xf]
  %v77 = vld [vmem:[%s3 + $0x4] sm:$0xf]
  %v78 = vld [vmem:[%s3 + $0x8] sm:$0xf]
  %v79 = vld [vmem:[%s3 + $0xc] sm:$0xf]
  %v80 = vld [vmem:[%s4] sm:$0x1]
  %v82 = vlaneseq
  %v83 = vshrl.u32 %v82, 7
  %v84 = vsub.s32 0, %v83
  %v85 = vrot.slane %v80, %v84
  %v91 = vunpack.c.l.b16 %v76
  %v92 = vunpack.c.l.b16 %v77
  %v93 = vunpack.c.l.b16 %v78
  %v94 = vunpack.c.l.b16 %v79
  %v95 = vpack.c.b16 %v92, %v91
  %v96 = vpack.c.b16 %v94, %v93
  %v100 = vsel %vm31, %v75, 0
  %102 = vmatprep.subr.bf16.mxu0 0
  %103 = vmatpush1.bf16.msra.mxu0 0
  %104 = vmatprep.subr.bf16.mxu0 0
  %105 = vmatpush1.bf16.msra.mxu0 0
  %106 = vmatprep.subr.bf16.mxu0 0
  %107 = vmatpush1.bf16.msra.mxu0 0
  %108 = vmatprep.subr.bf16.mxu0 0
  %109 = vmatpush1.bf16.msra.mxu0 0
  %110 = vmatprep.subr.bf16.mxu0 0
  %111 = vmatpush1.bf16.msra.mxu0 0
  %112 = vmatprep.subr.bf16.mxu0 0
  %113 = vmatpush1.bf16.msra.mxu0 0
  %114 = vmatprep.subr.bf16.mxu0 0
  %115 = vmatpush1.bf16.msra.mxu0 %v96
  %116 = vmatprep.subr.bf16.mxu0 0
  %117 = vmatpush1.bf16.msra.mxu0 %v95
  %118 = vmatprep.subr.bf16.mxu0 0
  %119 = vmatpush2.bf16.msra.mxu0 0
  %120 = vmatprep.subr.bf16.mxu0 0
  %121 = vmatpush2.bf16.msra.mxu0 0
  %122 = vmatprep.subr.bf16.mxu0 0
  %123 = vmatpush2.bf16.msra.mxu0 0
  %124 = vmatprep.subr.bf16.mxu0 0
  %125 = vmatpush2.bf16.msra.mxu0 0
  %126 = vmatprep.subr.bf16.mxu0 0
  %127 = vmatpush2.bf16.msra.mxu0 0
  %128 = vmatprep.subr.bf16.mxu0 0
  %129 = vmatpush2.bf16.msra.mxu0 0
  %130 = vmatprep.subr.bf16.mxu0 0
  %131 = vmatpush2.bf16.msra.mxu0 0
  %132 = vmatprep.subr.bf16.mxu0 0
  %133 = vmatpush2.bf16.msra.mxu0 0
  %134 = vmatprep.mubr.bf16.mxu0 0
  %135 = vmatmul.mubr.bf16.gmra.mxu0 %v100
  %v136 = vpop.f32.mrf.mxu0
  %v137 = vadd.f32 %v85, %v136
  %v138 = vpop.f32.mrf.mxu0
  %v139 = vpop.f32.mrf.mxu0
  %v140 = vadd.f32 %v85, %v139
  %v141 = vpop.f32.mrf.mxu0
  %142 = vdwg.mxu0
  %v143 = vmul.f32 %v137, 0.5
  %v144 = vmul.f32 %v140, 0.5
  %v145 = vmul.f32 %v137, %v137
  %v146 = vmul.f32 %v140, %v140
  %v147 = vmul.f32 %v137, %v145
  %v148 = vmul.f32 %v140, %v146
  %v149 = vmul.f32 %v147, 0.044715
  %v150 = vmul.f32 %v148, 0.044715
  %v151 = vadd.f32 %v137, %v149
  %v152 = vadd.f32 %v140, %v150
  %v153 = vmul.f32 %v151, 0.7978845
  %v154 = vmul.f32 %v152, 0.7978845
  %v155 = vtanh.pop %v153
  %v156 = vtanh.pop %v154
  %v157 = vadd.f32 %v155, 1.0
  %v158 = vadd.f32 %v156, 1.0
  %v159 = vmul.f32 %v143, %v157
  %v160 = vmul.f32 %v144, %v158
  %v161 = vpack.c.bf16 %v160, %v159
  %v162 = vld [vmem:[%s5] sm:$0xf]
  %v163 = vld [vmem:[%s5 + $0x4] sm:$0xf]
  %v164 = vld [vmem:[%s5 + $0x8] sm:$0xf]
  %v165 = vld [vmem:[%s5 + $0xc] sm:$0xf]
  %v166 = vld [vmem:[%s5 + $0x10] sm:$0xf]
  %v167 = vld [vmem:[%s5 + $0x14] sm:$0xf]
  %v168 = vld [vmem:[%s5 + $0x18] sm:$0xf]
  %v169 = vld [vmem:[%s5 + $0x1c] sm:$0xf]
  %v170 = vld [vmem:[%s5 + $0x20] sm:$0xf]
  %v171 = vld [vmem:[%s5 + $0x24] sm:$0xf]
  %v172 = vld [vmem:[%s5 + $0x28] sm:$0xf]
  %v173 = vld [vmem:[%s5 + $0x2c] sm:$0xf]
  %v174 = vld [vmem:[%s5 + $0x30] sm:$0xf]
  %v175 = vld [vmem:[%s5 + $0x34] sm:$0xf]
  %v176 = vld [vmem:[%s5 + $0x38] sm:$0xf]
  %v177 = vld [vmem:[%s5 + $0x3c] sm:$0xf]
  %v178 = vld [vmem:[%s6] sm:$0x1]
  %v180 = vlaneseq
  %v181 = vshrl.u32 %v180, 7
  %v182 = vsub.s32 0, %v181
  %v183 = vrot.slane %v178, %v182
  %v201 = vunpack.c.l.b16 %v162
  %v202 = vunpack.c.l.b16 %v163
  %v203 = vunpack.c.l.b16 %v164
  %v204 = vunpack.c.l.b16 %v165
  %v205 = vunpack.c.l.b16 %v166
  %v206 = vunpack.c.l.b16 %v167
  %v207 = vunpack.c.l.b16 %v168
  %v208 = vunpack.c.l.b16 %v169
  %v209 = vunpack.c.l.b16 %v170
  %v210 = vunpack.c.l.b16 %v171
  %v211 = vunpack.c.l.b16 %v172
  %v212 = vunpack.c.l.b16 %v173
  %v213 = vunpack.c.l.b16 %v174
  %v214 = vunpack.c.l.b16 %v175
  %v215 = vunpack.c.l.b16 %v176
  %v216 = vunpack.c.l.b16 %v177
  %v217 = vpack.c.b16 %v202, %v201
  %v218 = vpack.c.b16 %v204, %v203
  %v219 = vpack.c.b16 %v206, %v205
  %v220 = vpack.c.b16 %v208, %v207
  %v221 = vpack.c.b16 %v210, %v209
  %v222 = vpack.c.b16 %v212, %v211
  %v223 = vpack.c.b16 %v214, %v213
  %v224 = vpack.c.b16 %v216, %v215
  %233 = vmatprep.subr.bf16.mxu0 0
  %234 = vmatpush1.bf16.msra.mxu0 %v224
  %235 = vmatprep.subr.bf16.mxu0 0
  %236 = vmatpush1.bf16.msra.mxu0 %v223
  %237 = vmatprep.subr.bf16.mxu0 0
  %238 = vmatpush1.bf16.msra.mxu0 %v222
  %239 = vmatprep.subr.bf16.mxu0 0
  %240 = vmatpush1.bf16.msra.mxu0 %v221
  %241 = vmatprep.subr.bf16.mxu0 0
  %242 = vmatpush1.bf16.msra.mxu0 %v220
  %243 = vmatprep.subr.bf16.mxu0 0
  %244 = vmatpush1.bf16.msra.mxu0 %v219
  %245 = vmatprep.subr.bf16.mxu0 0
  %246 = vmatpush1.bf16.msra.mxu0 %v218
  %247 = vmatprep.subr.bf16.mxu0 0
  %248 = vmatpush1.bf16.msra.mxu0 %v217
  %249 = vmatprep.subr.bf16.mxu0 0
  %250 = vmatpush2.bf16.msra.mxu0 0
  %251 = vmatprep.subr.bf16.mxu0 0
  %252 = vmatpush2.bf16.msra.mxu0 0
  %253 = vmatprep.subr.bf16.mxu0 0
  %254 = vmatpush2.bf16.msra.mxu0 0
  %255 = vmatprep.subr.bf16.mxu0 0
  %256 = vmatpush2.bf16.msra.mxu0 0
  %257 = vmatprep.subr.bf16.mxu0 0
  %258 = vmatpush2.bf16.msra.mxu0 0
  %259 = vmatprep.subr.bf16.mxu0 0
  %260 = vmatpush2.bf16.msra.mxu0 0
  %261 = vmatprep.subr.bf16.mxu0 0
  %262 = vmatpush2.bf16.msra.mxu0 0
  %263 = vmatprep.subr.bf16.mxu0 0
  %264 = vmatpush2.bf16.msra.mxu0 0
  %265 = vmatprep.mubr.bf16.mxu0 0
  %266 = vmatmul.mubr.bf16.gmra.mxu0 %v161
  %v267 = vpop.f32.mrf.mxu0
  %v268 = vadd.f32 %v183, %v267
  %v269 = vpop.f32.mrf.mxu0
  %v270 = vpop.f32.mrf.mxu0
  %v271 = vadd.f32 %v183, %v270
  %v272 = vpop.f32.mrf.mxu0
  %273 = vdwg.mxu0
  %v274 = vadd.f32 %v27, %v268
  %v275 = vadd.f32 %v28, %v271
  %276 = vst.msk [vmem:[%s7] sm:$0xff] %vm31, %v274
  %277 = vst.msk [vmem:[%s7 + $0x8] sm:$0xff] %vm31, %v275
  // Predicated region
  $region30: #{_lambda_.9} parent=0 // pred_check
    _
  $region31: #{_lambda_.9} parent=0 // pred_check_branch
    %279 = sbr.rel (0) target = $region33
  $region32: #{_lambda_.9} parent=0 // pred_region
    _
  $region33: #{_lambda_.9} parent=0 // pred_fallthru
    _
  // Predicated region
  $region34: #{_lambda_.9} parent=0 // pred_check
    _
  $region35: #{_lambda_.9} parent=0 // pred_check_branch
    %281 = sbr.rel (0) target = $region37
  $region36: #{_lambda_.9} parent=0 // pred_region
    _
  $region37: #{_lambda_.9} parent=0 // pred_fallthru
    _

// kernel: _lambda_.8
$region0: #{_lambda_.8}
  #allocation0 [shape = 'u32[]', space=smem, size = 0x4, offset = 0x4, fixed_abs, tag = 'smem constant byte address 0x4 - core index']
  #allocation1 [shape = 'u32[144,128]{1,0:T(1,128)}', space=vmem, size = 0x12000, scoped, tag = 'internal scratch']
  %s0 = inlined_call_operand.vmem [shape: bf16[2,8,32], index: 0, kind: input, shape index: {}]
  %s1 = inlined_call_operand.vmem [shape: bf16[2,8,32], index: 1, kind: input, shape index: {}]
  %s2 = inlined_call_operand.vmem [shape: bf16[2,8,32], index: 2, kind: input, shape index: {}]
  %s3 = inlined_call_operand.vmem [shape: bf16[32,32], index: 3, kind: input, shape index: {}]
  %s4 = inlined_call_operand.vmem [shape: f32[1,32], index: 4, kind: input, shape index: {}]
  %s5 = inlined_call_operand.vmem [shape: f32[2,8,32], index: 5, kind: input, shape index: {}]
  %s6 = inlined_call_operand.vmem [shape: f32[2,8,32], index: 6, kind: output, shape index: {}]
  %s7 = sld [smem:[#allocation0]]
  $region65: #{_lambda_.8} parent=0
    _
  %s9 = ssub.s32 1, %s7
  %s10 = scalar_select 0, %s9, %s7
  loop: start=0, step=1, limit=4
  $region2: #{_lambda_.8} parent=0 // loop_pre_header
    _
  $region3: #{_lambda_.8} parent=0 // loop_header
    %s12 = sphi 0, %s16
    %p13 = scmp.ge.s32.totalorder %s12, 4
    %s19 = sphi 0, %s31
    %s20 = sphi 0, %s27
    %s21 = sphi 0, %s19
    %s22 = sphi 0, %s20
    %s23 = sphi 0, %s21
    %s24 = sphi 0, %s22
    %s36 = sphi 0, %s38
    %s39 = sphi 0, %s36
    %s40 = sphi 0, %s39
    %s56 = sphi 0, %s40
    %s64 = sphi 0, %s66
    %s67 = sphi 0, %s64
    %s68 = sphi 0, %s67
    %s84 = sphi 0, %s68
    %s92 = sphi 0, %s94
    %s95 = sphi 0, %s92
    %s96 = sphi 0, %s95
    %s112 = sphi 0, %s96
    %s118 = sphi 0, %s120
    %s121 = sphi 0, %s118
    %s122 = sphi 0, %s121
    %s138 = sphi 0, %s122
    %s142 = sphi 0, %s142
    %s144 = sphi 0, %s142
    %s145 = sphi 0, %s144
    %s159 = sphi 0, %s145
    %s165 = sphi 0, %s167
    %s168 = sphi 0, %s165
    %s169 = sphi 0, %s168
    %s185 = sphi 0, %s169
    %s191 = sphi 0, %s193
    %s194 = sphi 0, %s191
    %s195 = sphi 0, %s194
    %s211 = sphi 0, %s195
  $region4: #{_lambda_.8} parent=0 // loop_header_branch
    %15 = sbr.rel (%p13) target = $region8
  $region5: #{_lambda_.8} parent=0 // loop_body
    %s17 = ssub.s32 %s12, 1
    %s18 = ssub.s32 %s12, 2
    %s25 = sadd.s32 1, %s20
    %p26 = scmp.ge.s32.totalorder %s25, 1
    %s27 = scalar_select %p26, 0, %s25
    %s28 = sadd.s32 1, %s19
    %s29 = scalar_select %p26, %s28, %s19
    %p30 = scmp.ge.s32.totalorder %s29, 2
    %s31 = scalar_select %p30, 0, %s29
    %s32 = ssub.s32 %s19, %s31
    %s33 = ssub.s32 %s20, %s27
    %s34 = sor.u32 %s32, %s33
    %p35 = scmp.eq.s32.totalorder %s34, 0
    %s37 = sadd.s32 %s36, 1
    %s38 = scalar_select %p35, %s36, %s37
    %p41 = pneg %p35
    %p42 = scmp.eq.s32.totalorder %s12, 1
    %p43 = por %p41, %p42
    %p44 = scmp.ne.s32.totalorder %s36, %s39
    %p45 = scmp.eq.s32.totalorder %s12, 0
    %p46 = por %p44, %p45
    %p47 = scmp.ne.s32.totalorder %s36, %s39
    %p48 = scmp.eq.s32.totalorder %s17, 1
    %p49 = por %p47, %p48
    %p50 = scmp.ne.s32.totalorder %s39, %s40
    %p51 = scmp.eq.s32.totalorder %s17, 0
    %p52 = por %p50, %p51
    %p53 = scmp.ne.s32.totalorder %s39, %s40
    %p54 = scmp.eq.s32.totalorder %s18, 1
    %p55 = por %p53, %p54
    %p57 = scmp.ne.s32.totalorder %s40, %s56
    %p58 = scmp.eq.s32.totalorder %s18, 0
    %p59 = por %p57, %p58
    %s60 = ssub.s32 %s19, %s31
    %s61 = ssub.s32 %s20, %s27
    %s62 = sor.u32 %s60, %s61
    %p63 = scmp.eq.s32.totalorder %s62, 0
    %s65 = sadd.s32 %s64, 1
    %s66 = scalar_select %p63, %s64, %s65
    %p69 = pneg %p63
    %p70 = scmp.eq.s32.totalorder %s12, 1
    %p71 = por %p69, %p70
    %p72 = scmp.ne.s32.totalorder %s64, %s67
    %p73 = scmp.eq.s32.totalorder %s12, 0
    %p74 = por %p72, %p73
    %p75 = scmp.ne.s32.totalorder %s64, %s67
    %p76 = scmp.eq.s32.totalorder %s17, 1
    %p77 = por %p75, %p76
    %p78 = scmp.ne.s32.totalorder %s67, %s68
    %p79 = scmp.eq.s32.totalorder %s17, 0
    %p80 = por %p78, %p79
    %p81 = scmp.ne.s32.totalorder %s67, %s68
    %p82 = scmp.eq.s32.totalorder %s18, 1
    %p83 = por %p81, %p82
    %p85 = scmp.ne.s32.totalorder %s68, %s84
    %p86 = scmp.eq.s32.totalorder %s18, 0
    %p87 = por %p85, %p86
    %s88 = ssub.s32 %s19, %s31
    %s89 = ssub.s32 %s20, %s27
    %s90 = sor.u32 %s88, %s89
    %p91 = scmp.eq.s32.totalorder %s90, 0
    %s93 = sadd.s32 %s92, 1
    %s94 = scalar_select %p91, %s92, %s93
    %p97 = pneg %p91
    %p98 = scmp.eq.s32.totalorder %s12, 1
    %p99 = por %p97, %p98
    %p100 = scmp.ne.s32.totalorder %s92, %s95
    %p101 = scmp.eq.s32.totalorder %s12, 0
    %p102 = por %p100, %p101
    %p103 = scmp.ne.s32.totalorder %s92, %s95
    %p104 = scmp.eq.s32.totalorder %s17, 1
    %p105 = por %p103, %p104
    %p106 = scmp.ne.s32.totalorder %s95, %s96
    %p107 = scmp.eq.s32.totalorder %s17, 0
    %p108 = por %p106, %p107
    %p109 = scmp.ne.s32.totalorder %s95, %s96
    %p110 = scmp.eq.s32.totalorder %s18, 1
    %p111 = por %p109, %p110
    %p113 = scmp.ne.s32.totalorder %s96, %s112
    %p114 = scmp.eq.s32.totalorder %s18, 0
    %p115 = por %p113, %p114
    %s116 = ssub.s32 %s20, %s27
    %p117 = scmp.eq.s32.totalorder %s116, 0
    %s119 = sadd.s32 %s118, 1
    %s120 = scalar_select %p117, %s118, %s119
    %p123 = pneg %p117
    %p124 = scmp.eq.s32.totalorder %s12, 1
    %p125 = por %p123, %p124
    %p126 = scmp.ne.s32.totalorder %s118, %s121
    %p127 = scmp.eq.s32.totalorder %s12, 0
    %p128 = por %p126, %p127
    %p129 = scmp.ne.s32.totalorder %s118, %s121
    %p130 = scmp.eq.s32.totalorder %s17, 1
    %p131 = por %p129, %p130
    %p132 = scmp.ne.s32.totalorder %s121, %s122
    %p133 = scmp.eq.s32.totalorder %s17, 0
    %p134 = por %p132, %p133
    %p135 = scmp.ne.s32.totalorder %s121, %s122
    %p136 = scmp.eq.s32.totalorder %s18, 1
    %p137 = por %p135, %p136
    %p139 = scmp.ne.s32.totalorder %s122, %s138
    %p140 = scmp.eq.s32.totalorder %s18, 0
    %p141 = por %p139, %p140
    %s143 = sadd.s32 %s142, 1
    %p146 = scmp.eq.s32.totalorder %s12, 1
    %p147 = scmp.ne.s32.totalorder %s142, %s144
    %p148 = scmp.eq.s32.totalorder %s12, 0
    %p149 = por %p147, %p148
    %p150 = scmp.ne.s32.totalorder %s142, %s144
    %p151 = scmp.eq.s32.totalorder %s17, 1
    %p152 = por %p150, %p151
    %p153 = scmp.ne.s32.totalorder %s144, %s145
    %p154 = scmp.eq.s32.totalorder %s17, 0
    %p155 = por %p153, %p154
    %p156 = scmp.ne.s32.totalorder %s144, %s145
    %p157 = scmp.eq.s32.totalorder %s18, 1
    %p158 = por %p156, %p157
    %p160 = scmp.ne.s32.totalorder %s145, %s159
    %p161 = scmp.eq.s32.totalorder %s18, 0
    %p162 = por %p160, %p161
    %s163 = ssub.s32 %s19, %s31
    %p164 = scmp.eq.s32.totalorder %s163, 0
    %s166 = sadd.s32 %s165, 1
    %s167 = scalar_select %p164, %s165, %s166
    %p170 = pneg %p164
    %p171 = scmp.eq.s32.totalorder %s12, 1
    %p172 = por %p170, %p171
    %p173 = scmp.ne.s32.totalorder %s165, %s168
    %p174 = scmp.eq.s32.totalorder %s12, 0
    %p175 = por %p173, %p174
    %p176 = scmp.ne.s32.totalorder %s165, %s168
    %p177 = scmp.eq.s32.totalorder %s17, 1
    %p178 = por %p176, %p177
    %p179 = scmp.ne.s32.totalorder %s168, %s169
    %p180 = scmp.eq.s32.totalorder %s17, 0
    %p181 = por %p179, %p180
    %p182 = scmp.ne.s32.totalorder %s168, %s169
    %p183 = scmp.eq.s32.totalorder %s18, 1
    %p184 = por %p182, %p183
    %p186 = scmp.ne.s32.totalorder %s169, %s185
    %p187 = scmp.eq.s32.totalorder %s18, 0
    %p188 = por %p186, %p187
    %s189 = ssub.s32 %s19, %s31
    %p190 = scmp.eq.s32.totalorder %s189, 0
    %s192 = sadd.s32 %s191, 1
    %s193 = scalar_select %p190, %s191, %s192
    %p196 = pneg %p190
    %p197 = scmp.eq.s32.totalorder %s12, 1
    %p198 = por %p196, %p197
    %p199 = scmp.ne.s32.totalorder %s191, %s194
    %p200 = scmp.eq.s32.totalorder %s12, 0
    %p201 = por %p199, %p200
    %p202 = scmp.ne.s32.totalorder %s191, %s194
    %p203 = scmp.eq.s32.totalorder %s17, 1
    %p204 = por %p202, %p203
    %p205 = scmp.ne.s32.totalorder %s194, %s195
    %p206 = scmp.eq.s32.totalorder %s17, 0
    %p207 = por %p205, %p206
    %p208 = scmp.ne.s32.totalorder %s194, %s195
    %p209 = scmp.eq.s32.totalorder %s18, 1
    %p210 = por %p208, %p209
    %p212 = scmp.ne.s32.totalorder %s195, %s211
    %p213 = scmp.eq.s32.totalorder %s18, 0
    %p214 = por %p212, %p213
    %p215 = scmp.le.s32.totalorder 1, %s12
    %p216 = scmp.lt.s32.totalorder %s12, 3
    %p217 = pnand %p215, %p216
    %p218 = pneg %p217
    // Predicated region
    $region9: #{_lambda_.8} parent=5 // pred_check
      _
    $region10: #{_lambda_.8} parent=5 // pred_check_branch
      %220 = sbr.rel (%p217) target = $region12
    $region11: #{_lambda_.8} parent=5 // pred_region
      %s221 = ssub.s32 %s12, 1
      // Predicated region
      $region13: #{_lambda_.8} parent=11 // pred_check
        %p222 = pneg %p134
      $region14: #{_lambda_.8} parent=11 // pred_check_branch
        %224 = sbr.rel (%p222) target = $region16
      $region15: #{_lambda_.8} parent=11 // pred_region
        %s225 = smul.u32 4, %s22
        %p226 = scmp.lt.s32.totalorder %s225, 3
        %s227 = scalar_select %p226, %s225, 3
        %s228 = smul.addr %s227, 4
        %s229 = scalar_lea.vmem %s3, %s228
        %s230 = smul.u32 4, %s22
      $region16: #{_lambda_.8} parent=11 // pred_fallthru
        _
      // Predicated region
      $region17: #{_lambda_.8} parent=11 // pred_check
        %p231 = pneg %p155
      $region18: #{_lambda_.8} parent=11 // pred_check_branch
        %233 = sbr.rel (%p231) target = $region20
      $region19: #{_lambda_.8} parent=11 // pred_region
        _
      $region20: #{_lambda_.8} parent=11 // pred_fallthru
        _
    $region12: #{_lambda_.8} parent=5 // pred_fallthru
      _
    %p234 = scmp.lt.s32.totalorder %s12, 2
    // Predicated region
    $region21: #{_lambda_.8} parent=5 // pred_check
      %p235 = pneg %p234
    $region22: #{_lambda_.8} parent=5 // pred_check_branch
      %237 = sbr.rel (%p235) target = $region24
    $region23: #{_lambda_.8} parent=5 // pred_region
      // Predicated region
      $region25: #{_lambda_.8} parent=23 // pred_check
        %p238 = pneg %p46
      $region26: #{_lambda_.8} parent=23 // pred_check_branch
        %240 = sbr.rel (%p238) target = $region28
      $region27: #{_lambda_.8} parent=23 // pred_region
        %p241 = scmp.lt.s32.totalorder %s19, 1
        %s242 = scalar_select %p241, %s19, 1
        %p243 = scmp.lt.s32.totalorder %s20, 0
        %s244 = scalar_select %p243, %s20, 0
        %s245 = sadd.s32 %s244, %s242
        %s246 = smul.addr %s245, 4
        %s247 = scalar_lea.vmem %s0, %s246
      $region28: #{_lambda_.8} parent=23 // pred_fallthru
        _
      // Predicated region
      $region29: #{_lambda_.8} parent=23 // pred_check
        %p248 = pneg %p74
      $region30: #{_lambda_.8} parent=23 // pred_check_branch
        %250 = sbr.rel (%p248) target = $region32
      $region31: #{_lambda_.8} parent=23 // pred_region
        %p251 = scmp.lt.s32.totalorder %s19, 1
        %s252 = scalar_select %p251, %s19, 1
        %p253 = scmp.lt.s32.totalorder %s20, 0
        %s254 = scalar_select %p253, %s20, 0
        %s255 = sadd.s32 %s254, %s252
        %s256 = smul.addr %s255, 4
        %s257 = scalar_lea.vmem %s1, %s256
      $region32: #{_lambda_.8} parent=23 // pred_fallthru
        _
      // Predicated region
      $region33: #{_lambda_.8} parent=23 // pred_check
        %p258 = pneg %p102
      $region34: #{_lambda_.8} parent=23 // pred_check_branch
        %260 = sbr.rel (%p258) target = $region36
      $region35: #{_lambda_.8} parent=23 // pred_region
        %p261 = scmp.lt.s32.totalorder %s19, 1
        %s262 = scalar_select %p261, %s19, 1
        %p263 = scmp.lt.s32.totalorder %s20, 0
        %s264 = scalar_select %p263, %s20, 0
        %s265 = sadd.s32 %s264, %s262
        %s266 = smul.addr %s265, 4
        %s267 = scalar_lea.vmem %s2, %s266
      $region36: #{_lambda_.8} parent=23 // pred_fallthru
        _
      // Predicated region
      $region37: #{_lambda_.8} parent=23 // pred_check
        %p268 = pneg %p175
      $region38: #{_lambda_.8} parent=23 // pred_check_branch
        %270 = sbr.rel (%p268) target = $region40
      $region39: #{_lambda_.8} parent=23 // pred_region
        %p271 = scmp.lt.s32.totalorder %s19, 1
        %s272 = scalar_select %p271, %s19, 1
        %s273 = smul.addr %s272, 8
        %s274 = scalar_lea.vmem %s5, %s273
      $region40: #{_lambda_.8} parent=23 // pred_fallthru
        _
    $region24: #{_lambda_.8} parent=5 // pred_fallthru
      _
    %p275 = scmp.le.s32.totalorder 1, %s12
    %p276 = scmp.lt.s32.totalorder %s12, 3
    %p277 = pnand %p275, %p276
    %p278 = pneg %p277
    // Predicated region
    $region41: #{_lambda_.8} parent=5 // pred_check
      _
    $region42: #{_lambda_.8} parent=5 // pred_check_branch
      %280 = sbr.rel (%p277) target = $region44
    $region43: #{_lambda_.8} parent=5 // pred_region
      %s281 = ssub.s32 %s12, 1
      %p282 = scmp.lt.s32.totalorder %s21, 1
      %s283 = scalar_select %p282, %s21, 1
      %p284 = scmp.lt.s32.totalorder %s22, 0
      %s285 = scalar_select %p284, %s22, 0
      %s286 = sadd.s32 %s285, %s283
      %s287 = smul.addr %s286, 4
      %s288 = scalar_lea.vmem %s0, %s287
      %p289 = pneg %p52
      %p290 = pneg %p49
      %p291 = scmp.lt.s32.totalorder %s21, 1
      %s292 = scalar_select %p291, %s21, 1
      %p293 = scmp.lt.s32.totalorder %s22, 0
      %s294 = scalar_select %p293, %s22, 0
      %s295 = sadd.s32 %s294, %s292
      %s296 = smul.addr %s295, 4
      %s297 = scalar_lea.vmem %s1, %s296
      %p298 = pneg %p80
      %p299 = pneg %p77
      %p300 = scmp.lt.s32.totalorder %s21, 1
      %s301 = scalar_select %p300, %s21, 1
      %p302 = scmp.lt.s32.totalorder %s22, 0
      %s303 = scalar_select %p302, %s22, 0
      %s304 = sadd.s32 %s303, %s301
      %s305 = smul.addr %s304, 4
      %s306 = scalar_lea.vmem %s2, %s305
      %p307 = pneg %p108
      %p308 = pneg %p105
      %s309 = smul.u32 4, %s22
      %p310 = scmp.lt.s32.totalorder %s309, 3
      %s311 = scalar_select %p310, %s309, 3
      %s312 = smul.addr %s311, 4
      %s313 = scalar_lea.vmem %s3, %s312
      %p314 = pneg %p134
      %p315 = pneg %p131
      %p316 = pneg %p155
      %p317 = pneg %p152
      %p318 = scmp.lt.s32.totalorder %s21, 1
      %s319 = scalar_select %p318, %s21, 1
      %s320 = smul.addr %s319, 8
      %s321 = scalar_lea.vmem %s5, %s320
      %p322 = pneg %p181
      %p323 = pneg %p178
      %p324 = pneg %p207
      %p325 = pneg %p204
      %p326 = scmp.lt.s32.totalorder %s21, 1
      %s327 = scalar_select %p326, %s21, 1
      %s328 = smul.addr %s327, 8
      %s329 = scalar_lea.vmem %s6, %s328
      %p330 = scmp.lt.s32.totalorder %s21, 1
      %s331 = scalar_select %p330, %s21, 1
      %p332 = scmp.lt.s32.totalorder %s22, 0
      %s333 = scalar_select %p332, %s22, 0
      %s334 = sadd.s32 %s333, %s331
      %s335 = smul.addr %s334, 4
      %s336 = scalar_lea.vmem %s0, %s335
      %p337 = scmp.lt.s32.totalorder %s21, 1
      %s338 = scalar_select %p337, %s21, 1
      %p339 = scmp.lt.s32.totalorder %s22, 0
      %s340 = scalar_select %p339, %s22, 0
      %s341 = sadd.s32 %s340, %s338
      %s342 = smul.addr %s341, 4
      %s343 = scalar_lea.vmem %s1, %s342
      %p344 = scmp.lt.s32.totalorder %s21, 1
      %s345 = scalar_select %p344, %s21, 1
      %p346 = scmp.lt.s32.totalorder %s22, 0
      %s347 = scalar_select %p346, %s22, 0
      %s348 = sadd.s32 %s347, %s345
      %s349 = smul.addr %s348, 4
      %s350 = scalar_lea.vmem %s2, %s349
      %s351 = smul.u32 4, %s22
      %p352 = scmp.lt.s32.totalorder %s351, 3
      %s353 = scalar_select %p352, %s351, 3
      %s354 = smul.addr %s353, 4
      %s355 = scalar_lea.vmem %s3, %s354
      %s356 = smul.u32 4, %s22
      %p357 = scmp.lt.s32.totalorder %s21, 1
      %s358 = scalar_select %p357, %s21, 1
      %s359 = smul.addr %s358, 8
      %s360 = scalar_lea.vmem %s5, %s359
      %p361 = scmp.lt.s32.totalorder %s21, 1
      %s362 = scalar_select %p361, %s21, 1
      %s363 = smul.addr %s362, 8
      %s364 = scalar_lea.vmem %s6, %s363
      %v366 = vld [vmem:[%s336] sm:$0xf]
      %v367 = vld [vmem:[%s343] sm:$0xf]
      %v368 = vld [vmem:[%s350] sm:$0xf]
      %v369 = vlaneseq
      %v370 = vshrl.u32 %v369, 7
      %v371 = vlaneseq
      %v372 = vand.u32 %v371, 127
      %vm373 = vcmp.le.s32.totalorder %v372, %v370
      %vm374 = vcmask 64512
      %v376 = vsel %vm374, %v366, 0
      %v379 = vsel %vm374, %v367, 0
      %381 = vmatprep.subr.bf16.mxu0 0
      %382 = vmatpush1.bf16.xpose.msra.mxu0 0
      %383 = vmatprep.subr.bf16.mxu0 0
      %384 = vmatpush1.bf16.xpose.msra.mxu0 0
      %385 = vmatprep.subr.bf16.mxu0 0
      %386 = vmatpush1.bf16.xpose.msra.mxu0 0
      %387 = vmatprep.subr.bf16.mxu0 0
      %388 = vmatpush1.bf16.xpose.msra.mxu0 0
      %389 = vmatprep.subr.bf16.mxu0 0
      %390 = vmatpush1.bf16.xpose.msra.mxu0 0
      %391 = vmatprep.subr.bf16.mxu0 0
      %392 = vmatpush1.bf16.xpose.msra.mxu0 0
      %393 = vmatprep.subr.bf16.mxu0 0
      %394 = vmatpush1.bf16.xpose.msra.mxu0 0
      %395 = vmatprep.subr.bf16.mxu0 0
      %396 = vmatpush1.bf16.xpose.msra.mxu0 %v379
      %397 = vmatprep.subr.bf16.mxu0 0
      %398 = vmatpush2.bf16.xpose.msra.mxu0 0
      %399 = vmatprep.subr.bf16.mxu0 0
      %400 = vmatpush2.bf16.xpose.msra.mxu0 0
      %401 = vmatprep.subr.bf16.mxu0 0
      %402 = vmatpush2.bf16.xpose.msra.mxu0 0
      %403 = vmatprep.subr.bf16.mxu0 0
      %404 = vmatpush2.bf16.xpose.msra.mxu0 0
      %405 = vmatprep.subr.bf16.mxu0 0
      %406 = vmatpush2.bf16.xpose.msra.mxu0 0
      %407 = vmatprep.subr.bf16.mxu0 0
      %408 = vmatpush2.bf16.xpose.msra.mxu0 0
      %409 = vmatprep.subr.bf16.mxu0 0
      %410 = vmatpush2.bf16.xpose.msra.mxu0 0
      %411 = vmatprep.subr.bf16.mxu0 0
      %412 = vmatpush2.bf16.xpose.msra.mxu0 0
      %413 = vmatprep.mubr.bf16.mxu0 0
      %414 = vmatmul.mubr.bf16.gmra.mxu0 %v376
      %v415 = vpop.f32.mrf.mxu0
      %v416 = vadd.f32 0.0, %v415
      %v417 = vpop.f32.mrf.mxu0
      %v418 = vpop.f32.mrf.mxu0
      %v419 = vpop.f32.mrf.mxu0
      %420 = vdwg.mxu0
      %v421 = vmul.f32 %v416, 0.35355338
      %v422 = vsel %vm373, %v421, -inf
      %v423 = vsel %vm374, %v422, -inf
      %424 = vmax.xlane.f32.xlu0 %v423
      %v425 = vpop.xlane.xlu0 %424
      %v426 = vsub.f32 %v422, %v425
      %v427 = vmul.f32 %v426, 1.442695
      %v428 = vpow.pop %v427
      %v429 = vsel %vm374, %v428, 0.0
      %430 = vadd.xlane.f32.xlu0 %v429
      %v431 = vpop.xlane.xlu0 %430
      %v432 = vrcp.pop %v431
      %v433 = vmul.f32 %v428, %v432
      %v434 = vpack.c.bf16 %v433, %v433
      %v436 = vsel %vm374, %v434, 0
      %vm438 = vcmask 1043456
      %v440 = vsel %vm438, %v368, 0
      %442 = vmatprep.subr.bf16.mxu0 0
      %443 = vmatpush1.bf16.msra.mxu0 0
      %444 = vmatprep.subr.bf16.mxu0 0
      %445 = vmatpush1.bf16.msra.mxu0 0
      %446 = vmatprep.subr.bf16.mxu0 0
      %447 = vmatpush1.bf16.msra.mxu0 0
      %448 = vmatprep.subr.bf16.mxu0 0
      %449 = vmatpush1.bf16.msra.mxu0 0
      %450 = vmatprep.subr.bf16.mxu0 0
      %451 = vmatpush1.bf16.msra.mxu0 0
      %452 = vmatprep.subr.bf16.mxu0 0
      %453 = vmatpush1.bf16.msra.mxu0 0
      %454 = vmatprep.subr.bf16.mxu0 0
      %455 = vmatpush1.bf16.msra.mxu0 0
      %456 = vmatprep.subr.bf16.mxu0 0
      %457 = vmatpush1.bf16.msra.mxu0 %v440
      %458 = vmatprep.subr.bf16.mxu0 0
      %459 = vmatpush2.bf16.msra.mxu0 0
      %460 = vmatprep.subr.bf16.mxu0 0
      %461 = vmatpush2.bf16.msra.mxu0 0
      %462 = vmatprep.subr.bf16.mxu0 0
      %463 = vmatpush2.bf16.msra.mxu0 0
      %464 = vmatprep.subr.bf16.mxu0 0
      %465 = vmatpush2.bf16.msra.mxu0 0
      %466 = vmatprep.subr.bf16.mxu0 0
      %467 = vmatpush2.bf16.msra.mxu0 0
      %468 = vmatprep.subr.bf16.mxu0 0
      %469 = vmatpush2.bf16.msra.mxu0 0
      %470 = vmatprep.subr.bf16.mxu0 0
      %471 = vmatpush2.bf16.msra.mxu0 0
      %472 = vmatprep.subr.bf16.mxu0 0
      %473 = vmatpush2.bf16.msra.mxu0 0
      %474 = vmatprep.mubr.bf16.mxu0 0
      %475 = vmatmul.mubr.bf16.gmra.mxu0 %v436
      %v476 = vpop.f32.mrf.mxu0
      %v477 = vadd.f32 0.0, %v476
      %v478 = vpop.f32.mrf.mxu0
      %v479 = vpop.f32.mrf.mxu0
      %v480 = vpop.f32.mrf.mxu0
      %481 = vdwg.mxu0
      %v483 = vunpack.c.l.b16 %v366
      %v484 = vpack.c.b16 %v483, %v483
      %485 = vrot.lane.b32.xlu0 %v484, 120
      %v486 = vpop.permute.xlu0 %485
      %v488 = vunpack.c.l.b16 %v367
      %v489 = vpack.c.b16 %v488, %v488
      %490 = vrot.lane.b32.xlu0 %v489, 120
      %v491 = vpop.permute.xlu0 %490
      %v493 = vsel %vm374, %v486, 0
      %v496 = vsel %vm374, %v491, 0
      %498 = vmatprep.subr.bf16.mxu0 0
      %499 = vmatpush1.bf16.xpose.msra.mxu0 0
      %500 = vmatprep.subr.bf16.mxu0 0
      %501 = vmatpush1.bf16.xpose.msra.mxu0 0
      %502 = vmatprep.subr.bf16.mxu0 0
      %503 = vmatpush1.bf16.xpose.msra.mxu0 0
      %504 = vmatprep.subr.bf16.mxu0 0
      %505 = vmatpush1.bf16.xpose.msra.mxu0 0
      %506 = vmatprep.subr.bf16.mxu0 0
      %507 = vmatpush1.bf16.xpose.msra.mxu0 0
      %508 = vmatprep.subr.bf16.mxu0 0
      %509 = vmatpush1.bf16.xpose.msra.mxu0 0
      %510 = vmatprep.subr.bf16.mxu0 0
      %511 = vmatpush1.bf16.xpose.msra.mxu0 0
      %512 = vmatprep.subr.bf16.mxu0 0
      %513 = vmatpush1.bf16.xpose.msra.mxu0 %v496
      %514 = vmatprep.subr.bf16.mxu0 0
      %515 = vmatpush2.bf16.xpose.msra.mxu0 0
      %516 = vmatprep.subr.bf16.mxu0 0
      %517 = vmatpush2.bf16.xpose.msra.mxu0 0
      %518 = vmatprep.subr.bf16.mxu0 0
      %519 = vmatpush2.bf16.xpose.msra.mxu0 0
      %520 = vmatprep.subr.bf16.mxu0 0
      %521 = vmatpush2.bf16.xpose.msra.mxu0 0
      %522 = vmatprep.subr.bf16.mxu0 0
      %523 = vmatpush2.bf16.xpose.msra.mxu0 0
      %524 = vmatprep.subr.bf16.mxu0 0
      %525 = vmatpush2.bf16.xpose.msra.mxu0 0
      %526 = vmatprep.subr.bf16.mxu0 0
      %527 = vmatpush2.bf16.xpose.msra.mxu0 0
      %528 = vmatprep.subr.bf16.mxu0 0
      %529 = vmatpush2.bf16.xpose.msra.mxu0 0
      %530 = vmatprep.mubr.bf16.mxu0 0
      %531 = vmatmul.mubr.bf16.gmra.mxu0 %v493
      %v532 = vpop.f32.mrf.mxu0
      %v533 = vadd.f32 0.0, %v532
      %v534 = vpop.f32.mrf.mxu0
      %v535 = vpop.f32.mrf.mxu0
      %v536 = vpop.f32.mrf.mxu0
      %537 = vdwg.mxu0
      %v538 = vmul.f32 %v533, 0.35355338
      %v539 = vsel %vm373, %v538, -inf
      %v540 = vsel %vm374, %v539, -inf
      %541 = vmax.xlane.f32.xlu0 %v540
      %v542 = vpop.xlane.xlu0 %541
      %v543 = vsub.f32 %v539, %v542
      %v544 = vmul.f32 %v543, 1.442695
      %v545 = vpow.pop %v544
      %v546 = vsel %vm374, %v545, 0.0
      %547 = vadd.xlane.f32.xlu0 %v546
      %v548 = vpop.xlane.xlu0 %547
      %v549 = vrcp.pop %v548
      %v550 = vmul.f32 %v545, %v549
      %v551 = vpack.c.bf16 %v550, %v550
      %v553 = vunpack.c.l.b16 %v368
      %v554 = vpack.c.b16 %v553, %v553
      %555 = vrot.lane.b32.xlu0 %v554, 120
      %v556 = vpop.permute.xlu0 %555
      %v558 = vsel %vm374, %v551, 0
      %v561 = vsel %vm438, %v556, 0
      %563 = vmatprep.subr.bf16.mxu0 0
      %564 = vmatpush1.bf16.msra.mxu0 0
      %565 = vmatprep.subr.bf16.mxu0 0
      %566 = vmatpush1.bf16.msra.mxu0 0
      %567 = vmatprep.subr.bf16.mxu0 0
      %568 = vmatpush1.bf16.msra.mxu0 0
      %569 = vmatprep.subr.bf16.mxu0 0
      %570 = vmatpush1.bf16.msra.mxu0 0
      %571 = vmatprep.subr.bf16.mxu0 0
      %572 = vmatpush1.bf16.msra.mxu0 0
      %573 = vmatprep.subr.bf16.mxu0 0
      %574 = vmatpush1.bf16.msra.mxu0 0
      %575 = vmatprep.subr.bf16.mxu0 0
      %576 = vmatpush1.bf16.msra.mxu0 0
      %577 = vmatprep.subr.bf16.mxu0 0
      %578 = vmatpush1.bf16.msra.mxu0 %v561
      %579 = vmatprep.subr.bf16.mxu0 0
      %580 = vmatpush2.bf16.msra.mxu0 0
      %581 = vmatprep.subr.bf16.mxu0 0
      %582 = vmatpush2.bf16.msra.mxu0 0
      %583 = vmatprep.subr.bf16.mxu0 0
      %584 = vmatpush2.bf16.msra.mxu0 0
      %585 = vmatprep.subr.bf16.mxu0 0
      %586 = vmatpush2.bf16.msra.mxu0 0
      %587 = vmatprep.subr.bf16.mxu0 0
      %588 = vmatpush2.bf16.msra.mxu0 0
      %589 = vmatprep.subr.bf16.mxu0 0
      %590 = vmatpush2.bf16.msra.mxu0 0
      %591 = vmatprep.subr.bf16.mxu0 0
      %592 = vmatpush2.bf16.msra.mxu0 0
      %593 = vmatprep.subr.bf16.mxu0 0
      %594 = vmatpush2.bf16.msra.mxu0 0
      %595 = vmatprep.mubr.bf16.mxu0 0
      %596 = vmatmul.mubr.bf16.gmra.mxu0 %v558
      %v597 = vpop.f32.mrf.mxu0
      %v598 = vadd.f32 0.0, %v597
      %v599 = vpop.f32.mrf.mxu0
      %v600 = vpop.f32.mrf.mxu0
      %v601 = vpop.f32.mrf.mxu0
      %602 = vdwg.mxu0
      %603 = vrot.lane.b32.xlu0 %v484, 112
      %v604 = vpop.permute.xlu0 %603
      %605 = vrot.lane.b32.xlu0 %v489, 112
      %v606 = vpop.permute.xlu0 %605
      %v608 = vsel %vm374, %v604, 0
      %v611 = vsel %vm374, %v606, 0
      %613 = vmatprep.subr.bf16.mxu0 0
      %614 = vmatpush1.bf16.xpose.msra.mxu0 0
      %615 = vmatprep.subr.bf16.mxu0 0
      %616 = vmatpush1.bf16.xpose.msra.mxu0 0
      %617 = vmatprep.subr.bf16.mxu0 0
      %618 = vmatpush1.bf16.xpose.msra.mxu0 0
      %619 = vmatprep.subr.bf16.mxu0 0
      %620 = vmatpush1.bf16.xpose.msra.mxu0 0
      %621 = vmatprep.subr.bf16.mxu0 0
      %622 = vmatpush1.bf16.xpose.msra.mxu0 0
      %623 = vmatprep.subr.bf16.mxu0 0
      %624 = vmatpush1.bf16.xpose.msra.mxu0 0
      %625 = vmatprep.subr.bf16.mxu0 0
      %626 = vmatpush1.bf16.xpose.msra.mxu0 0
      %627 = vmatprep.subr.bf16.mxu0 0
      %628 = vmatpush1.bf16.xpose.msra.mxu0 %v611
      %629 = vmatprep.subr.bf16.mxu0 0
      %630 = vmatpush2.bf16.xpose.msra.mxu0 0
      %631 = vmatprep.subr.bf16.mxu0 0
      %632 = vmatpush2.bf16.xpose.msra.mxu0 0
      %633 = vmatprep.subr.bf16.mxu0 0
      %634 = vmatpush2.bf16.xpose.msra.mxu0 0
      %635 = vmatprep.subr.bf16.mxu0 0
      %636 = vmatpush2.bf16.xpose.msra.mxu0 0
      %637 = vmatprep.subr.bf16.mxu0 0
      %638 = vmatpush2.bf16.xpose.msra.mxu0 0
      %639 = vmatprep.subr.bf16.mxu0 0
      %640 = vmatpush2.bf16.xpose.msra.mxu0 0
      %641 = vmatprep.subr.bf16.mxu0 0
      %642 = vmatpush2.bf16.xpose.msra.mxu0 0
      %643 = vmatprep.subr.bf16.mxu0 0
      %644 = vmatpush2.bf16.xpose.msra.mxu0 0
      %645 = vmatprep.mubr.bf16.mxu0 0
      %646 = vmatmul.mubr.bf16.gmra.mxu0 %v608
      %v647 = vpop.f32.mrf.mxu0
      %v648 = vadd.f32 0.0, %v647
      %v649 = vpop.f32.mrf.mxu0
      %v650 = vpop.f32.mrf.mxu0
      %v651 = vpop.f32.mrf.mxu0
      %652 = vdwg.mxu0
      %v653 = vmul.f32 %v648, 0.35355338
      %v654 = vsel %vm373, %v653, -inf
      %v655 = vsel %vm374, %v654, -inf
      %656 = vmax.xlane.f32.xlu0 %v655
      %v657 = vpop.xlane.xlu0 %656
      %v658 = vsub.f32 %v654, %v657
      %v659 = vmul.f32 %v658, 1.442695
      %v660 = vpow.pop %v659
      %v661 = vsel %vm374, %v660, 0.0
      %662 = vadd.xlane.f32.xlu0 %v661
      %v663 = vpop.xlane.xlu0 %662
      %v664 = vrcp.pop %v663
      %v665 = vmul.f32 %v660, %v664
      %v666 = vpack.c.bf16 %v665, %v665
      %667 = vrot.lane.b32.xlu0 %v554, 112
      %v668 = vpop.permute.xlu0 %667
      %v670 = vsel %vm374, %v666, 0
      %v673 = vsel %vm438, %v668, 0
      %675 = vmatprep.subr.bf16.mxu0 0
      %676 = vmatpush1.bf16.msra.mxu0 0
      %677 = vmatprep.subr.bf16.mxu0 0
      %678 = vmatpush1.bf16.msra.mxu0 0
      %679 = vmatprep.subr.bf16.mxu0 0
      %680 = vmatpush1.bf16.msra.mxu0 0
      %681 = vmatprep.subr.bf16.mxu0 0
      %682 = vmatpush1.bf16.msra.mxu0 0
      %683 = vmatprep.subr.bf16.mxu0 0
      %684 = vmatpush1.bf16.msra.mxu0 0
      %685 = vmatprep.subr.bf16.mxu0 0
      %686 = vmatpush1.bf16.msra.mxu0 0
      %687 = vmatprep.subr.bf16.mxu0 0
      %688 = vmatpush1.bf16.msra.mxu0 0
      %689 = vmatprep.subr.bf16.mxu0 0
      %690 = vmatpush1.bf16.msra.mxu0 %v673
      %691 = vmatprep.subr.bf16.mxu0 0
      %692 = vmatpush2.bf16.msra.mxu0 0
      %693 = vmatprep.subr.bf16.mxu0 0
      %694 = vmatpush2.bf16.msra.mxu0 0
      %695 = vmatprep.subr.bf16.mxu0 0
      %696 = vmatpush2.bf16.msra.mxu0 0
      %697 = vmatprep.subr.bf16.mxu0 0
      %698 = vmatpush2.bf16.msra.mxu0 0
      %699 = vmatprep.subr.bf16.mxu0 0
      %700 = vmatpush2.bf16.msra.mxu0 0
      %701 = vmatprep.subr.bf16.mxu0 0
      %702 = vmatpush2.bf16.msra.mxu0 0
      %703 = vmatprep.subr.bf16.mxu0 0
      %704 = vmatpush2.bf16.msra.mxu0 0
      %705 = vmatprep.subr.bf16.mxu0 0
      %706 = vmatpush2.bf16.msra.mxu0 0
      %707 = vmatprep.mubr.bf16.mxu0 0
      %708 = vmatmul.mubr.bf16.gmra.mxu0 %v670
      %v709 = vpop.f32.mrf.mxu0
      %v710 = vadd.f32 0.0, %v709
      %v711 = vpop.f32.mrf.mxu0
      %v712 = vpop.f32.mrf.mxu0
      %v713 = vpop.f32.mrf.mxu0
      %714 = vdwg.mxu0
      %715 = vrot.lane.b32.xlu0 %v484, 104
      %v716 = vpop.permute.xlu0 %715
      %717 = vrot.lane.b32.xlu0 %v489, 104
      %v718 = vpop.permute.xlu0 %717
      %v720 = vsel %vm374, %v716, 0
      %v723 = vsel %vm374, %v718, 0
      %725 = vmatprep.subr.bf16.mxu0 0
      %726 = vmatpush1.bf16.xpose.msra.mxu0 0
      %727 = vmatprep.subr.bf16.mxu0 0
      %728 = vmatpush1.bf16.xpose.msra.mxu0 0
      %729 = vmatprep.subr.bf16.mxu0 0
      %730 = vmatpush1.bf16.xpose.msra.mxu0 0
      %731 = vmatprep.subr.bf16.mxu0 0
      %732 = vmatpush1.bf16.xpose.msra.mxu0 0
      %733 = vmatprep.subr.bf16.mxu0 0
      %734 = vmatpush1.bf16.xpose.msra.mxu0 0
      %735 = vmatprep.subr.bf16.mxu0 0
      %736 = vmatpush1.bf16.xpose.msra.mxu0 0
      %737 = vmatprep.subr.bf16.mxu0 0
      %738 = vmatpush1.bf16.xpose.msra.mxu0 0
      %739 = vmatprep.subr.bf16.mxu0 0
      %740 = vmatpush1.bf16.xpose.msra.mxu0 %v723
      %741 = vmatprep.subr.bf16.mxu0 0
      %742 = vmatpush2.bf16.xpose.msra.mxu0 0
      %743 = vmatprep.subr.bf16.mxu0 0
      %744 = vmatpush2.bf16.xpose.msra.mxu0 0
      %745 = vmatprep.subr.bf16.mxu0 0
      %746 = vmatpush2.bf16.xpose.msra.mxu0 0
      %747 = vmatprep.subr.bf16.mxu0 0
      %748 = vmatpush2.bf16.xpose.msra.mxu0 0
      %749 = vmatprep.subr.bf16.mxu0 0
      %750 = vmatpush2.bf16.xpose.msra.mxu0 0
      %751 = vmatprep.subr.bf16.mxu0 0
      %752 = vmatpush2.bf16.xpose.msra.mxu0 0
      %753 = vmatprep.subr.bf16.mxu0 0
      %754 = vmatpush2.bf16.xpose.msra.mxu0 0
      %755 = vmatprep.subr.bf16.mxu0 0
      %756 = vmatpush2.bf16.xpose.msra.mxu0 0
      %757 = vmatprep.mubr.bf16.mxu0 0
      %758 = vmatmul.mubr.bf16.gmra.mxu0 %v720
      %v759 = vpop.f32.mrf.mxu0
      %v760 = vadd.f32 0.0, %v759
      %v761 = vpop.f32.mrf.mxu0
      %v762 = vpop.f32.mrf.mxu0
      %v763 = vpop.f32.mrf.mxu0
      %764 = vdwg.mxu0
      %v765 = vmul.f32 %v760, 0.35355338
      %v766 = vsel %vm373, %v765, -inf
      %v767 = vsel %vm374, %v766, -inf
      %768 = vmax.xlane.f32.xlu0 %v767
      %v769 = vpop.xlane.xlu0 %768
      %v770 = vsub.f32 %v766, %v769
      %v771 = vmul.f32 %v770, 1.442695
      %v772 = vpow.pop %v771
      %v773 = vsel %vm374, %v772, 0.0
      %774 = vadd.xlane.f32.xlu0 %v773
      %v775 = vpop.xlane.xlu0 %774
      %v776 = vrcp.pop %v775
      %v777 = vmul.f32 %v772, %v776
      %v778 = vpack.c.bf16 %v777, %v777
      %779 = vrot.lane.b32.xlu0 %v554, 104
      %v780 = vpop.permute.xlu0 %779
      %v782 = vsel %vm374, %v778, 0
      %v785 = vsel %vm438, %v780, 0
      %787 = vmatprep.subr.bf16.mxu0 0
      %788 = vmatpush1.bf16.msra.mxu0 0
      %789 = vmatprep.subr.bf16.mxu0 0
      %790 = vmatpush1.bf16.msra.mxu0 0
      %791 = vmatprep.subr.bf16.mxu0 0
      %792 = vmatpush1.bf16.msra.mxu0 0
      %793 = vmatprep.subr.bf16.mxu0 0
      %794 = vmatpush1.bf16.msra.mxu0 0
      %795 = vmatprep.subr.bf16.mxu0 0
      %796 = vmatpush1.bf16.msra.mxu0 0
      %797 = vmatprep.subr.bf16.mxu0 0
      %798 = vmatpush1.bf16.msra.mxu0 0
      %799 = vmatprep.subr.bf16.mxu0 0
      %800 = vmatpush1.bf16.msra.mxu0 0
      %801 = vmatprep.subr.bf16.mxu0 0
      %802 = vmatpush1.bf16.msra.mxu0 %v785
      %803 = vmatprep.subr.bf16.mxu0 0
      %804 = vmatpush2.bf16.msra.mxu0 0
      %805 = vmatprep.subr.bf16.mxu0 0
      %806 = vmatpush2.bf16.msra.mxu0 0
      %807 = vmatprep.subr.bf16.mxu0 0
      %808 = vmatpush2.bf16.msra.mxu0 0
      %809 = vmatprep.subr.bf16.mxu0 0
      %810 = vmatpush2.bf16.msra.mxu0 0
      %811 = vmatprep.subr.bf16.mxu0 0
      %812 = vmatpush2.bf16.msra.mxu0 0
      %813 = vmatprep.subr.bf16.mxu0 0
      %814 = vmatpush2.bf16.msra.mxu0 0
      %815 = vmatprep.subr.bf16.mxu0 0
      %816 = vmatpush2.bf16.msra.mxu0 0
      %817 = vmatprep.subr.bf16.mxu0 0
      %818 = vmatpush2.bf16.msra.mxu0 0
      %819 = vmatprep.mubr.bf16.mxu0 0
      %820 = vmatmul.mubr.bf16.gmra.mxu0 %v782
      %v821 = vpop.f32.mrf.mxu0
      %v822 = vadd.f32 0.0, %v821
      %v823 = vpop.f32.mrf.mxu0
      %v824 = vpop.f32.mrf.mxu0
      %v825 = vpop.f32.mrf.mxu0
      %826 = vdwg.mxu0
      %828 = vrot.lane.b32.xlu0 %v598, 8
      %v829 = vpop.permute.xlu0 %828
      %832 = vrot.lane.b32.xlu0 %v710, 16
      %v833 = vpop.permute.xlu0 %832
      %836 = vrot.lane.b32.xlu0 %v822, 24
      %v837 = vpop.permute.xlu0 %836
      %v839 = vsel %vm374, %v477, %v829
      %vm840 = vcmask 130048
      %v841 = vsel %vm840, %v839, %v833
      %vm842 = vcmask 195584
      %v843 = vsel %vm842, %v841, %v837
      %v844 = vpack.c.bf16 %v843, %v843
      %v845 = vld [vmem:[%s355] sm:$0xf]
      %v846 = vld [vmem:[%s355 + $0x4] sm:$0xf]
      %v847 = vld [vmem:[%s355 + $0x8] sm:$0xf]
      %v848 = vld [vmem:[%s355 + $0xc] sm:$0xf]
      %v853 = vunpack.c.l.b16 %v845
      %v854 = vunpack.c.l.b16 %v846
      %v855 = vunpack.c.l.b16 %v847
      %v856 = vunpack.c.l.b16 %v848
      %v857 = vpack.c.b16 %v854, %v853
      %v858 = vpack.c.b16 %v856, %v855
      %vm861 = vcmask 261120
      %v863 = vsel %vm861, %v844, 0
      %865 = vmatprep.subr.bf16.mxu0 0
      %866 = vmatpush1.bf16.msra.mxu0 0
      %867 = vmatprep.subr.bf16.mxu0 0
      %868 = vmatpush1.bf16.msra.mxu0 0
      %869 = vmatprep.subr.bf16.mxu0 0
      %870 = vmatpush1.bf16.msra.mxu0 0
      %871 = vmatprep.subr.bf16.mxu0 0
      %872 = vmatpush1.bf16.msra.mxu0 0
      %873 = vmatprep.subr.bf16.mxu0 0
      %874 = vmatpush1.bf16.msra.mxu0 0
      %875 = vmatprep.subr.bf16.mxu0 0
      %876 = vmatpush1.bf16.msra.mxu0 0
      %877 = vmatprep.subr.bf16.mxu0 0
      %878 = vmatpush1.bf16.msra.mxu0 %v858
      %879 = vmatprep.subr.bf16.mxu0 0
      %880 = vmatpush1.bf16.msra.mxu0 %v857
      %881 = vmatprep.subr.bf16.mxu0 0
      %882 = vmatpush2.bf16.msra.mxu0 0
      %883 = vmatprep.subr.bf16.mxu0 0
      %884 = vmatpush2.bf16.msra.mxu0 0
      %885 = vmatprep.subr.bf16.mxu0 0
      %886 = vmatpush2.bf16.msra.mxu0 0
      %887 = vmatprep.subr.bf16.mxu0 0
      %888 = vmatpush2.bf16.msra.mxu0 0
      %889 = vmatprep.subr.bf16.mxu0 0
      %890 = vmatpush2.bf16.msra.mxu0 0
      %891 = vmatprep.subr.bf16.mxu0 0
      %892 = vmatpush2.bf16.msra.mxu0 0
      %893 = vmatprep.subr.bf16.mxu0 0
      %894 = vmatpush2.bf16.msra.mxu0 0
      %895 = vmatprep.subr.bf16.mxu0 0
      %896 = vmatpush2.bf16.msra.mxu0 0
      %897 = vmatprep.mubr.bf16.mxu0 0
      %898 = vmatmul.mubr.bf16.gmra.mxu0 %v863
      %v899 = vpop.f32.mrf.mxu0
      %v900 = vadd.f32 0.0, %v899
      %v901 = vpop.f32.mrf.mxu0
      %v902 = vpop.f32.mrf.mxu0
      %v903 = vpop.f32.mrf.mxu0
      %904 = vdwg.mxu0
      %p905 = scmp.eq.s32.totalorder %s22, 0
      // Predicated region
      $region45: #{_lambda_.8} parent=43 // pred_check
        %p906 = pneg %p905
      $region46: #{_lambda_.8} parent=43 // pred_check_branch
        %908 = sbr.rel (%p906) target = $region48
      $region47: #{_lambda_.8} parent=43 // pred_region
        %v909 = vld [vmem:[%s360] sm:$0xff]
        %v910 = vld [vmem:[%s4] sm:$0x1]
        %v912 = vlaneseq
        %v913 = vshrl.u32 %v912, 7
        %v914 = vsub.s32 0, %v913
        %v915 = vrot.slane %v910, %v914
        %v917 = vadd.f32 %v909, %v915
        %v918 = vadd.f32 %v917, %v900
        %919 = vst.msk [vmem:[%s364] sm:$0xff] %vm861, %v918
      $region48: #{_lambda_.8} parent=43 // pred_fallthru
        _
      %p920 = scmp.ne.s32.totalorder %s22, 0
      // Predicated region
      $region49: #{_lambda_.8} parent=43 // pred_check
        %p921 = pneg %p920
      $region50: #{_lambda_.8} parent=43 // pred_check_branch
        %923 = sbr.rel (%p921) target = $region52
      $region51: #{_lambda_.8} parent=43 // pred_region
        %v924 = vld [vmem:[%s364] sm:$0xff]
        %v925 = vadd.f32 %v924, %v900
        %926 = vst.msk [vmem:[%s364] sm:$0xff] %vm861, %v925
      $region52: #{_lambda_.8} parent=43 // pred_fallthru
        _
      %p927 = scmp.lt.s32.totalorder %s21, 1
      %s928 = scalar_select %p927, %s21, 1
      %s929 = smul.addr %s928, 8
      %s930 = scalar_lea.vmem %s6, %s929
      // Predicated region
      $region53: #{_lambda_.8} parent=43 // pred_check
        %p931 = pneg %p204
      $region54: #{_lambda_.8} parent=43 // pred_check_branch
        %933 = sbr.rel (%p931) target = $region56
      $region55: #{_lambda_.8} parent=43 // pred_region
        _
      $region56: #{_lambda_.8} parent=43 // pred_fallthru
        _
    $region44: #{_lambda_.8} parent=5 // pred_fallthru
      _
    %p934 = scmp.le.s32.totalorder 2, %s12
    // Predicated region
    $region57: #{_lambda_.8} parent=5 // pred_check
      %p935 = pneg %p934
    $region58: #{_lambda_.8} parent=5 // pred_check_branch
      %937 = sbr.rel (%p935) target = $region60
    $region59: #{_lambda_.8} parent=5 // pred_region
      %s938 = ssub.s32 %s12, 2
      // Predicated region
      $region61: #{_lambda_.8} parent=59 // pred_check
        %p939 = pneg %p210
      $region62: #{_lambda_.8} parent=59 // pred_check_branch
        %941 = sbr.rel (%p939) target = $region64
      $region63: #{_lambda_.8} parent=59 // pred_region
        %p942 = scmp.lt.s32.totalorder %s23, 1
        %s943 = scalar_select %p942, %s23, 1
        %s944 = smul.addr %s943, 8
        %s945 = scalar_lea.vmem %s6, %s944
      $region64: #{_lambda_.8} parent=59 // pred_fallthru
        _
    $region60: #{_lambda_.8} parent=5 // pred_fallthru
      _
  $region6: #{_lambda_.8} parent=0 // loop_footer
    %s16 = sadd.s32 1, %s12
  $region7: #{_lambda_.8} parent=0 // loop_footer_branch
    %11 = sbr.rel target = $region3
  $region8: #{_lambda_.8} parent=0 // loop_exit
    _

</llo_original>
